<compile_context>
chip_gen: v5e
topology: v5e:2x2
jax: 0.10.0
libtpu: 0.0.40
codegen_flags: <defaults>
</compile_context>

<pallas_src>
import jax
import jax.numpy as jnp
from jax.experimental import pallas as pl
from jax.experimental.pallas import tpu as pltpu

_LN_EPS = 1e-5
_INV_SQRT2 = 0.7071067811865476


def _ln(v, w, b):
    """LayerNorm over the last axis (PyTorch semantics, biased variance), f32."""
    mu = jnp.mean(v, axis=-1, keepdims=True)
    var = jnp.mean((v - mu) ** 2, axis=-1, keepdims=True)
    return (v - mu) * jax.lax.rsqrt(var + _LN_EPS) * w + b


def _mm(a, w):
    """a @ w on the MXU (operands already bf16), f32 accumulation."""
    return jnp.dot(a, w, preferred_element_type=jnp.float32)


def _ab_t(a, b):
    """a @ b.T (contract the last dim of both), f32 accumulation."""
    return jax.lax.dot_general(a, b, (((1,), (1,)), ((), ())),
                               preferred_element_type=jnp.float32)


def _pick_f_chunk(dff, target=1024):
    """Largest Dff chunk <= target that divides Dff (multiple of 128 if possible)."""
    if dff <= target:
        return dff
    c = target - (target % 128)
    while c >= 128:
        if dff % c == 0:
            return c
        c -= 128
    return dff


def _vmem_limit_bytes():
    """Per-generation VMEM limit: physical capacity minus Mosaic headroom."""
    try:
        cap = int(pltpu.get_tpu_info().vmem_capacity_bytes)
    except Exception:
        cap = 64 * 1024 * 1024
    return max(32 * 1024 * 1024, cap - 16 * 1024 * 1024)


# ---------------------------------------------------------------------------
# Fused decoder kernel: grid = (B, L); one batch element per "parallel" step,
# layers streamed along the inner "arbitrary" axis with auto-pipelined weight
# prefetch.  The (S, D) activation is resident in a VMEM scratch; only the
# (n_cls, Np) mask tile is written to HBM (at the last layer step).
# ---------------------------------------------------------------------------
def _build_fused_kernel(n_patches, n_cls, d_model, d_ff, n_heads):
    S = n_patches + n_cls
    hd = d_model // n_heads
    scale = hd ** (-0.5)
    D = d_model
    Dff = d_ff
    f_chunk = _pick_f_chunk(Dff)
    bf16 = jnp.bfloat16

    def kernel(xs_ref,                                    # (S, D) bf16 projected+cls
               lnv_ref,                                   # (4, D) f32: ln1_w, ln1_b, ln2_w, ln2_b
               qkvw_ref, qkvb_ref, pw_ref, pb_ref,        # attention weights
               f1w_ref, f1b_ref, f2w_ref, f2b_ref,        # MLP weights
               dnw_ref, dnb_ref, ppw_ref, pcw_ref,        # head weights
               mnw_ref, mnb_ref,                          # mask_norm (transposed)
               masks_ref, x_scr):
        layer = pl.program_id(1)
        n_layers = pl.num_programs(1)

        # ---- first layer step: load the pre-projected activation ----
        @pl.when(layer == 0)
        def _init():
            x_scr[...] = xs_ref[...].astype(jnp.float32)

        xv = x_scr[...]                                    # (S, D) f32

        # ---- attention (pre-LN) ----
        h = _ln(xv, lnv_ref[0:1, :], lnv_ref[1:2, :])
        qkv = (_mm(h.astype(bf16), qkvw_ref[...]) + qkvb_ref[...]).astype(bf16)  # (S, 3D)

        head_outs = []
        for hi in range(n_heads):                          # static unroll
            lo = hi * hd
            qh = qkv[:, lo:lo + hd]
            kh = qkv[:, D + lo:D + lo + hd]
            vh = qkv[:, 2 * D + lo:2 * D + lo + hd]
            s = _ab_t(qh, kh) * scale                      # (S, S) f32
            s = s - jnp.max(s, axis=-1, keepdims=True)     # f32 softmax (v5e-safe)
            e = jnp.exp(s)
            p = e * pl.reciprocal(jnp.sum(e, axis=-1, keepdims=True), approx=True)
            head_outs.append(_mm(p.astype(bf16), vh).astype(bf16))   # (S, hd) bf16
        attn = jnp.concatenate(head_outs, axis=-1)         # (S, D) bf16
        x1 = xv + _mm(attn, pw_ref[...]) + pb_ref[...]     # (S, D) f32

        # ---- MLP (pre-LN, exact GELU), chunked along Dff ----
        h2b = _ln(x1, lnv_ref[2:3, :], lnv_ref[3:4, :]).astype(bf16)
        x2 = x1 + f2b_ref[...]
        for c0 in range(0, Dff, f_chunk):                  # static chunk offsets
            c1 = c0 + f_chunk
            hh = _mm(h2b, f1w_ref[:, c0:c1]) + f1b_ref[:, c0:c1]     # (S, chunk) f32
            hh = 0.5 * hh * (1.0 + jax.lax.erf(hh * _INV_SQRT2))
            x2 = x2 + _mm(hh.astype(bf16), f2w_ref[c0:c1, :])
        x_scr[...] = x2

        # ---- last layer step: mask head, written lane-dense as (n_cls, Np) ----
        @pl.when(layer == n_layers - 1)
        def _head():
            xn = _ln(x2, dnw_ref[...], dnb_ref[...]).astype(bf16)    # (S, D)
            patches = _mm(xn[0:n_patches, :], ppw_ref[...])          # (Np, D)  f32
            clsf = _mm(xn[n_patches:S, :], pcw_ref[...])             # (n_cls, D)
            patches = patches * jax.lax.rsqrt(
                jnp.sum(patches * patches, axis=-1, keepdims=True))
            clsf = clsf * jax.lax.rsqrt(
                jnp.sum(clsf * clsf, axis=-1, keepdims=True))
            masks_t = _ab_t(clsf.astype(bf16), patches.astype(bf16))  # (n_cls, Np)
            # mask_norm: LayerNorm over the class axis (= axis 0 in this layout)
            mu = jnp.mean(masks_t, axis=0, keepdims=True)
            var = jnp.mean((masks_t - mu) ** 2, axis=0, keepdims=True)
            masks_ref[...] = ((masks_t - mu) * jax.lax.rsqrt(var + _LN_EPS)
                              * mnw_ref[...] + mnb_ref[...])

    return kernel


# ---------------------------------------------------------------------------
# Parameter construction (deterministic, mirrors MaskTransformer.__init__).
# Linear weights are stored transposed: (in, out), so y = x @ W + b.
# ---------------------------------------------------------------------------
def make_params(key, cfg):
    d, dff = cfg["d_model"], cfg["d_ff"]
    ncls, denc, L = cfg["n_cls"], cfg["d_encoder"], cfg["n_layers"]
    keys = iter(jax.random.split(key, 4 + 4 * L))

    def lin(din, dout):
        w = 0.02 * jax.random.normal(next(keys), (din, dout), jnp.float32)
        b = jnp.zeros((1, dout), jnp.float32)
        return w, b

    p = {}
    p["proj_dec_w"], p["proj_dec_b"] = lin(denc, d)
    p["cls_emb"] = 0.02 * jax.random.normal(next(keys), (1, ncls, d), jnp.float32)
    scale = d ** (-0.5)
    p["proj_patch"] = scale * jax.random.normal(next(keys), (d, d), jnp.float32)
    p["proj_classes"] = scale * jax.random.normal(next(keys), (d, d), jnp.float32)
    p["decoder_norm_w"] = jnp.ones((1, d), jnp.float32)
    p["decoder_norm_b"] = jnp.zeros((1, d), jnp.float32)
    p["mask_norm_w"] = jnp.ones((1, ncls), jnp.float32)
    p["mask_norm_b"] = jnp.zeros((1, ncls), jnp.float32)

    blocks = []
    for _ in range(L):
        blk = {
            "ln1_w": jnp.ones((1, d), jnp.float32),
            "ln1_b": jnp.zeros((1, d), jnp.float32),
            "ln2_w": jnp.ones((1, d), jnp.float32),
            "ln2_b": jnp.zeros((1, d), jnp.float32),
        }
        blk["qkv_w"], blk["qkv_b"] = lin(d, 3 * d)
        blk["proj_w"], blk["proj_b"] = lin(d, d)
        blk["fc1_w"], blk["fc1_b"] = lin(d, dff)
        blk["fc2_w"], blk["fc2_b"] = lin(dff, d)
        blocks.append(blk)
    p["blocks"] = blocks
    return p


# ---------------------------------------------------------------------------
# Forward: XLA proj_dec + cls concat, one fused pallas_call for the decoder,
# then a free reshape for 'b (h w) n -> b n h w'.
# ---------------------------------------------------------------------------
def mask_transformer_forward(params, x, im_size, cfg):
    H, W = im_size
    GS = H // cfg["patch_size"]
    n_cls, D, Dff = cfg["n_cls"], cfg["d_model"], cfg["d_ff"]
    nh, L = cfg["n_heads"], cfg["n_layers"]
    B, Np, _ = x.shape
    S = Np + n_cls
    bf16 = jnp.bfloat16
    blocks = params["blocks"]

    # Hoisted: proj_dec + cls-token concat (plain XLA), handed to the kernel in bf16.
    xp = x @ params["proj_dec_w"] + params["proj_dec_b"]               # (B, Np, D)
    cls = jnp.broadcast_to(params["cls_emb"], (B, n_cls, D))
    xs = jnp.concatenate([xp, cls], axis=1).astype(bf16)               # (B, S, D)

    def stk(name, dt=jnp.float32):
        return jnp.stack([blk[name] for blk in blocks], axis=0).astype(dt)

    # Per-layer weights stacked on a leading L axis; MXU weights in bf16.
    lnv = jnp.stack(
        [jnp.concatenate([blk["ln1_w"], blk["ln1_b"], blk["ln2_w"], blk["ln2_b"]],
                         axis=0) for blk in blocks], axis=0)           # (L, 4, D) f32
    qkv_w, qkv_b = stk("qkv_w", bf16), stk("qkv_b")                    # (L, D, 3D), (L, 1, 3D)
    proj_w, proj_b = stk("proj_w", bf16), stk("proj_b")                # (L, D, D), (L, 1, D)
    fc1_w, fc1_b = stk("fc1_w", bf16), stk("fc1_b")                    # (L, D, Dff)
    fc2_w, fc2_b = stk("fc2_w", bf16), stk("fc2_b")                    # (L, Dff, D)

    mnw_t = params["mask_norm_w"].reshape(n_cls, 1)                    # transposed layout
    mnb_t = params["mask_norm_b"].reshape(n_cls, 1)

    kernel = _build_fused_kernel(Np, n_cls, D, Dff, nh)

    def _const(shape):
        return pl.BlockSpec(shape, lambda b, l: (0,) * len(shape))

    def _per_layer(tail):
        return pl.BlockSpec((None,) + tail, lambda b, l: (l,) + (0,) * len(tail))

    masks_t = pl.pallas_call(
        kernel,
        out_shape=jax.ShapeDtypeStruct((B, n_cls, Np), jnp.float32),
        grid=(B, L),
        in_specs=[
            pl.BlockSpec((None, S, D), lambda b, l: (b, 0, 0)),        # projected tokens (bf16)
            _per_layer((4, D)),                                        # packed LN vecs
            _per_layer((D, 3 * D)), _per_layer((1, 3 * D)),            # qkv w, b
            _per_layer((D, D)), _per_layer((1, D)),                    # attn proj w, b
            _per_layer((D, Dff)), _per_layer((1, Dff)),                # fc1 w, b
            _per_layer((Dff, D)), _per_layer((1, D)),                  # fc2 w, b
            _const((1, D)), _const((1, D)),                            # decoder_norm w, b
            _const((D, D)), _const((D, D)),                            # proj_patch / proj_classes (bf16)
            _const((n_cls, 1)), _const((n_cls, 1)),                    # mask_norm w, b (transposed)
        ],
        out_specs=pl.BlockSpec((None, n_cls, Np), lambda b, l: (b, 0, 0)),
        scratch_shapes=[pltpu.VMEM((S, D), jnp.float32)],              # resident activation
        compiler_params=pltpu.CompilerParams(
            dimension_semantics=("parallel", "arbitrary"),
            vmem_limit_bytes=_vmem_limit_bytes(),                      # per-generation budget
        ),
    )(
        xs,
        lnv, qkv_w, qkv_b, proj_w, proj_b,
        fc1_w, fc1_b, fc2_w, fc2_b,
        params["decoder_norm_w"], params["decoder_norm_b"],
        params["proj_patch"].astype(bf16), params["proj_classes"].astype(bf16),
        mnw_t, mnb_t,
    )

    # masks_t[b, n, h*GS + w]  ->  (B, n_cls, GS, GS): a pure reshape, no transpose.
    return masks_t.reshape(B, n_cls, GS, GS)


# ---------------------------------------------------------------------------
# Pure-JAX f32 reference for a numerical sanity check.
# ---------------------------------------------------------------------------
def ref_forward(params, x, im_size, cfg):
    H, W = im_size
    GS = H // cfg["patch_size"]
    d, nh, ncls = cfg["d_model"], cfg["n_heads"], cfg["n_cls"]
    hd = d // nh
    B = x.shape[0]

    x = x @ params["proj_dec_w"] + params["proj_dec_b"]
    x = jnp.concatenate(
        [x, jnp.broadcast_to(params["cls_emb"], (B, ncls, d))], axis=1)

    for blk in params["blocks"]:
        h = _ln(x, blk["ln1_w"], blk["ln1_b"])
        qkv = h @ blk["qkv_w"] + blk["qkv_b"]
        q, k, v = qkv[..., :d], qkv[..., d:2 * d], qkv[..., 2 * d:]
        sh = lambda t: t.reshape(B, -1, nh, hd).transpose(0, 2, 1, 3)
        q, k, v = sh(q), sh(k), sh(v)
        s = jnp.einsum("bhqd,bhkd->bhqk", q, k) * hd ** (-0.5)
        p = jax.nn.softmax(s, axis=-1)
        o = jnp.einsum("bhqk,bhkd->bhqd", p, v).transpose(0, 2, 1, 3).reshape(B, -1, d)
        x = x + (o @ blk["proj_w"] + blk["proj_b"])
        h2 = _ln(x, blk["ln2_w"], blk["ln2_b"])
        hh = h2 @ blk["fc1_w"] + blk["fc1_b"]
        hh = 0.5 * hh * (1.0 + jax.lax.erf(hh * _INV_SQRT2))
        x = x + (hh @ blk["fc2_w"] + blk["fc2_b"])

    x = _ln(x, params["decoder_norm_w"], params["decoder_norm_b"])
    patches, clsf = x[:, :-ncls], x[:, -ncls:]
    patches = patches @ params["proj_patch"]
    clsf = clsf @ params["proj_classes"]
    patches = patches / jnp.linalg.norm(patches, axis=-1, keepdims=True)
    clsf = clsf / jnp.linalg.norm(clsf, axis=-1, keepdims=True)
    masks = patches @ jnp.swapaxes(clsf, 1, 2)
    masks = _ln(masks, params["mask_norm_w"], params["mask_norm_b"])
    return masks.reshape(B, GS, GS, ncls).transpose(0, 3, 1, 2)


if __name__ == "__main__":
    cfg = dict(n_cls=4, patch_size=4, d_encoder=32, n_layers=2, n_heads=2,
               d_model=32, d_ff=64, drop_path_rate=0.0, dropout=0.0)

    key = jax.random.PRNGKey(0)
    kp, kx = jax.random.split(key)
    params = make_params(kp, cfg)

    B, H, W = 2, 16, 16
    GS = H // cfg["patch_size"]
    x = jax.random.normal(kx, (B, GS * GS, cfg["d_encoder"]), jnp.float32)

    out = mask_transformer_forward(params, x, (H, W), cfg)
    out = jax.block_until_ready(out)

    assert out.shape == (B, cfg["n_cls"], GS, GS), out.shape
    ref = ref_forward(params, x, (H, W), cfg)
    err = float(jnp.max(jnp.abs(out - ref)))
    # bf16 MXU operands everywhere (incl. mask head / bf16 input activation)
    # -> loose tolerance vs. the f32 reference.
    assert err < 1e-1, f"max abs err {err}"

    print("KERNEL_OK")
</pallas_src>

<mosaic_0001>
module attributes {stable_mosaic.version = 11 : i64} {
  func.func @kernel(%arg0: i32, %arg1: i32, %arg2: memref<1x20x32xbf16, #tpu.memory_space<vmem>>, %arg3: memref<1x4x32xf32, #tpu.memory_space<vmem>>, %arg4: memref<1x32x96xbf16, #tpu.memory_space<vmem>>, %arg5: memref<1x1x96xf32, #tpu.memory_space<vmem>>, %arg6: memref<1x32x32xbf16, #tpu.memory_space<vmem>>, %arg7: memref<1x1x32xf32, #tpu.memory_space<vmem>>, %arg8: memref<1x32x64xbf16, #tpu.memory_space<vmem>>, %arg9: memref<1x1x64xf32, #tpu.memory_space<vmem>>, %arg10: memref<1x64x32xbf16, #tpu.memory_space<vmem>>, %arg11: memref<1x1x32xf32, #tpu.memory_space<vmem>>, %arg12: memref<1x32xf32, #tpu.memory_space<vmem>>, %arg13: memref<1x32xf32, #tpu.memory_space<vmem>>, %arg14: memref<32x32xbf16, #tpu.memory_space<vmem>>, %arg15: memref<32x32xbf16, #tpu.memory_space<vmem>>, %arg16: memref<4x1xf32, #tpu.memory_space<vmem>>, %arg17: memref<4x1xf32, #tpu.memory_space<vmem>>, %arg18: memref<1x4x16xf32, #tpu.memory_space<vmem>>, %arg19: memref<20x32xf32, #tpu.memory_space<vmem>>) attributes {dimension_semantics = [#tpu.dimension_semantics<parallel>, #tpu.dimension_semantics<arbitrary>], iteration_bounds = array<i64: 2, 2>, scalar_prefetch = 0 : i64, scratch_operands = 1 : i64, tpu.core_type = #tpu.core_type<tc>, window_params = [{transform_indices = @transform_0, window_bounds = array<i64: 1, 20, 32>}, {transform_indices = @transform_1, window_bounds = array<i64: 1, 4, 32>}, {transform_indices = @transform_2, window_bounds = array<i64: 1, 32, 96>}, {transform_indices = @transform_3, window_bounds = array<i64: 1, 1, 96>}, {transform_indices = @transform_4, window_bounds = array<i64: 1, 32, 32>}, {transform_indices = @transform_5, window_bounds = array<i64: 1, 1, 32>}, {transform_indices = @transform_6, window_bounds = array<i64: 1, 32, 64>}, {transform_indices = @transform_7, window_bounds = array<i64: 1, 1, 64>}, {transform_indices = @transform_8, window_bounds = array<i64: 1, 64, 32>}, {transform_indices = @transform_9, window_bounds = array<i64: 1, 1, 32>}, {pipeline_mode = #tpu.pipeline_mode<synchronous>, transform_indices = @transform_10, window_bounds = array<i64: 1, 32>}, {pipeline_mode = #tpu.pipeline_mode<synchronous>, transform_indices = @transform_11, window_bounds = array<i64: 1, 32>}, {pipeline_mode = #tpu.pipeline_mode<synchronous>, transform_indices = @transform_12, window_bounds = array<i64: 32, 32>}, {pipeline_mode = #tpu.pipeline_mode<synchronous>, transform_indices = @transform_13, window_bounds = array<i64: 32, 32>}, {pipeline_mode = #tpu.pipeline_mode<synchronous>, transform_indices = @transform_14, window_bounds = array<i64: 4, 1>}, {pipeline_mode = #tpu.pipeline_mode<synchronous>, transform_indices = @transform_15, window_bounds = array<i64: 4, 1>}, {transform_indices = @transform_16, window_bounds = array<i64: 1, 4, 16>}]} {
    %c0_i32 = arith.constant 0 : i32
    %0 = arith.cmpi eq, %arg1, %c0_i32 : i32
    %1 = arith.extui %0 : i1 to i32
    %c0_i32_0 = arith.constant 0 : i32
    %2 = arith.cmpi ne, %1, %c0_i32_0 : i32
    scf.if %2 {
      %c0_64 = arith.constant 0 : index
      %c0_65 = arith.constant 0 : index
      %c0_66 = arith.constant 0 : index
      %141 = vector.load %arg2[%c0_64, %c0_65, %c0_66] : memref<1x20x32xbf16, #tpu.memory_space<vmem>>, vector<1x20x32xbf16>
      %142 = vector.shape_cast %141 : vector<1x20x32xbf16> to vector<20x32xbf16>
      %143 = arith.extf %142 : vector<20x32xbf16> to vector<20x32xf32>
      %c0_67 = arith.constant 0 : index
      %c0_68 = arith.constant 0 : index
      %144 = vector.load %arg19[%c0_67, %c0_68] : memref<20x32xf32, #tpu.memory_space<vmem>>, vector<20x32xf32>
      tpu.vector_store %arg19[%c0_67, %c0_68], %143 {strides = array<i32>} : memref<20x32xf32, #tpu.memory_space<vmem>>, vector<20x32xf32>,
    } else {
    }
    %c0 = arith.constant 0 : index
    %c0_1 = arith.constant 0 : index
    %3 = vector.load %arg19[%c0, %c0_1] : memref<20x32xf32, #tpu.memory_space<vmem>>, vector<20x32xf32>
    %c0_2 = arith.constant 0 : index
    %c0_3 = arith.constant 0 : index
    %c0_4 = arith.constant 0 : index
    %4 = vector.load %arg3[%c0_2, %c0_3, %c0_4] : memref<1x4x32xf32, #tpu.memory_space<vmem>>, vector<1x1x32xf32>
    %5 = vector.shape_cast %4 : vector<1x1x32xf32> to vector<1x32xf32>
    %c0_5 = arith.constant 0 : index
    %c1 = arith.constant 1 : index
    %c0_6 = arith.constant 0 : index
    %6 = vector.load %arg3[%c0_5, %c1, %c0_6] : memref<1x4x32xf32, #tpu.memory_space<vmem>>, vector<1x1x32xf32>
    %7 = vector.shape_cast %6 : vector<1x1x32xf32> to vector<1x32xf32>
    %cst = arith.constant dense<0.000000e+00> : vector<20xf32>
    %8 = vector.multi_reduction <add>, %3, %cst [1] : vector<20x32xf32> to vector<20xf32>
    %9 = vector.shape_cast %8 : vector<20xf32> to vector<20x1xf32>
    %cst_7 = arith.constant 3.200000e+01 : f32
    %10 = vector.broadcast %cst_7 : f32 to vector<20x1xf32>
    %11 = arith.divf %9, %10 : vector<20x1xf32>
    %12 = vector.broadcast %11 : vector<20x1xf32> to vector<20x32xf32>
    %13 = arith.subf %3, %12 : vector<20x32xf32>
    %14 = arith.mulf %13, %13 : vector<20x32xf32>
    %cst_8 = arith.constant dense<0.000000e+00> : vector<20xf32>
    %15 = vector.multi_reduction <add>, %14, %cst_8 [1] : vector<20x32xf32> to vector<20xf32>
    %16 = vector.shape_cast %15 : vector<20xf32> to vector<20x1xf32>
    %cst_9 = arith.constant 3.200000e+01 : f32
    %17 = vector.broadcast %cst_9 : f32 to vector<20x1xf32>
    %18 = arith.divf %16, %17 : vector<20x1xf32>
    %19 = vector.broadcast %11 : vector<20x1xf32> to vector<20x32xf32>
    %20 = arith.subf %3, %19 : vector<20x32xf32>
    %cst_10 = arith.constant 9.99999974E-6 : f32
    %21 = vector.broadcast %cst_10 : f32 to vector<20x1xf32>
    %22 = arith.addf %18, %21 : vector<20x1xf32>
    %23 = math.rsqrt %22 : vector<20x1xf32>
    %24 = vector.broadcast %23 : vector<20x1xf32> to vector<20x32xf32>
    %25 = arith.mulf %20, %24 : vector<20x32xf32>
    %26 = vector.broadcast %5 : vector<1x32xf32> to vector<20x32xf32>
    %27 = arith.mulf %25, %26 : vector<20x32xf32>
    %28 = vector.broadcast %7 : vector<1x32xf32> to vector<20x32xf32>
    %29 = arith.addf %27, %28 : vector<20x32xf32>
    %30 = arith.truncf %29 : vector<20x32xf32> to vector<20x32xbf16>
    %c0_11 = arith.constant 0 : index
    %c0_12 = arith.constant 0 : index
    %c0_13 = arith.constant 0 : index
    %31 = vector.load %arg4[%c0_11, %c0_12, %c0_13] : memref<1x32x96xbf16, #tpu.memory_space<vmem>>, vector<1x32x96xbf16>
    %32 = vector.shape_cast %31 : vector<1x32x96xbf16> to vector<32x96xbf16>
    %cst_14 = arith.constant dense<0.000000e+00> : vector<20x96xf32>
    %33 = tpu.matmul %30, %32, %cst_14 {dimension_numbers = #tpu.dot_dimension_numbers<[1], [0], [0], [1], [0, 0, 1, 1], [], []>} : vector<20x32xbf16>, vector<32x96xbf16>, vector<20x96xf32> -> vector<20x96xf32>
    %c0_15 = arith.constant 0 : index
    %c0_16 = arith.constant 0 : index
    %c0_17 = arith.constant 0 : index
    %34 = vector.load %arg5[%c0_15, %c0_16, %c0_17] : memref<1x1x96xf32, #tpu.memory_space<vmem>>, vector<1x1x96xf32>
    %35 = vector.shape_cast %34 : vector<1x1x96xf32> to vector<1x96xf32>
    %36 = vector.broadcast %35 : vector<1x96xf32> to vector<20x96xf32>
    %37 = arith.addf %33, %36 : vector<20x96xf32>
    %38 = arith.truncf %37 : vector<20x96xf32> to vector<20x96xbf16>
    %39 = vector.extract_strided_slice %38 {offsets = [0, 0], sizes = [20, 16], strides = [1, 1]} : vector<20x96xbf16> to vector<20x16xbf16>
    %40 = vector.extract_strided_slice %38 {offsets = [0, 32], sizes = [20, 16], strides = [1, 1]} : vector<20x96xbf16> to vector<20x16xbf16>
    %41 = vector.extract_strided_slice %38 {offsets = [0, 64], sizes = [20, 16], strides = [1, 1]} : vector<20x96xbf16> to vector<20x16xbf16>
    %cst_18 = arith.constant dense<0.000000e+00> : vector<20x20xf32>
    %42 = tpu.matmul %39, %40, %cst_18 {dimension_numbers = #tpu.dot_dimension_numbers<[1], [1], [0], [0], [0, 0, 1, 0], [], []>} : vector<20x16xbf16>, vector<20x16xbf16>, vector<20x20xf32> -> vector<20x20xf32>
    %cst_19 = arith.constant 2.500000e-01 : f32
    %43 = vector.broadcast %cst_19 : f32 to vector<20x20xf32>
    %44 = arith.mulf %42, %43 : vector<20x20xf32>
    %cst_20 = arith.constant dense<0xFF800000> : vector<20xf32>
    %45 = vector.multi_reduction <maximumf>, %44, %cst_20 [1] : vector<20x20xf32> to vector<20xf32>
    %46 = vector.shape_cast %45 : vector<20xf32> to vector<20x1xf32>
    %47 = vector.broadcast %46 : vector<20x1xf32> to vector<20x20xf32>
    %48 = arith.subf %44, %47 : vector<20x20xf32>
    %49 = math.exp %48 : vector<20x20xf32>
    %cst_21 = arith.constant dense<0.000000e+00> : vector<20xf32>
    %50 = vector.multi_reduction <add>, %49, %cst_21 [1] : vector<20x20xf32> to vector<20xf32>
    %51 = vector.shape_cast %50 : vector<20xf32> to vector<20x1xf32>
    %52 = tpu.reciprocal %51 {approx = true} : vector<20x1xf32> -> vector<20x1xf32>
    %53 = vector.broadcast %52 : vector<20x1xf32> to vector<20x20xf32>
    %54 = arith.mulf %49, %53 : vector<20x20xf32>
    %55 = arith.truncf %54 : vector<20x20xf32> to vector<20x20xbf16>
    %cst_22 = arith.constant dense<0.000000e+00> : vector<20x16xf32>
    %56 = tpu.matmul %55, %41, %cst_22 {dimension_numbers = #tpu.dot_dimension_numbers<[1], [0], [0], [1], [0, 0, 1, 1], [], []>} : vector<20x20xbf16>, vector<20x16xbf16>, vector<20x16xf32> -> vector<20x16xf32>
    %57 = arith.truncf %56 : vector<20x16xf32> to vector<20x16xbf16>
    %58 = vector.extract_strided_slice %38 {offsets = [0, 16], sizes = [20, 16], strides = [1, 1]} : vector<20x96xbf16> to vector<20x16xbf16>
    %59 = vector.extract_strided_slice %38 {offsets = [0, 48], sizes = [20, 16], strides = [1, 1]} : vector<20x96xbf16> to vector<20x16xbf16>
    %60 = vector.extract_strided_slice %38 {offsets = [0, 80], sizes = [20, 16], strides = [1, 1]} : vector<20x96xbf16> to vector<20x16xbf16>
    %cst_23 = arith.constant dense<0.000000e+00> : vector<20x20xf32>
    %61 = tpu.matmul %58, %59, %cst_23 {dimension_numbers = #tpu.dot_dimension_numbers<[1], [1], [0], [0], [0, 0, 1, 0], [], []>} : vector<20x16xbf16>, vector<20x16xbf16>, vector<20x20xf32> -> vector<20x20xf32>
    %cst_24 = arith.constant 2.500000e-01 : f32
    %62 = vector.broadcast %cst_24 : f32 to vector<20x20xf32>
    %63 = arith.mulf %61, %62 : vector<20x20xf32>
    %cst_25 = arith.constant dense<0xFF800000> : vector<20xf32>
    %64 = vector.multi_reduction <maximumf>, %63, %cst_25 [1] : vector<20x20xf32> to vector<20xf32>
    %65 = vector.shape_cast %64 : vector<20xf32> to vector<20x1xf32>
    %66 = vector.broadcast %65 : vector<20x1xf32> to vector<20x20xf32>
    %67 = arith.subf %63, %66 : vector<20x20xf32>
    %68 = math.exp %67 : vector<20x20xf32>
    %cst_26 = arith.constant dense<0.000000e+00> : vector<20xf32>
    %69 = vector.multi_reduction <add>, %68, %cst_26 [1] : vector<20x20xf32> to vector<20xf32>
    %70 = vector.shape_cast %69 : vector<20xf32> to vector<20x1xf32>
    %71 = tpu.reciprocal %70 {approx = true} : vector<20x1xf32> -> vector<20x1xf32>
    %72 = vector.broadcast %71 : vector<20x1xf32> to vector<20x20xf32>
    %73 = arith.mulf %68, %72 : vector<20x20xf32>
    %74 = arith.truncf %73 : vector<20x20xf32> to vector<20x20xbf16>
    %cst_27 = arith.constant dense<0.000000e+00> : vector<20x16xf32>
    %75 = tpu.matmul %74, %60, %cst_27 {dimension_numbers = #tpu.dot_dimension_numbers<[1], [0], [0], [1], [0, 0, 1, 1], [], []>} : vector<20x20xbf16>, vector<20x16xbf16>, vector<20x16xf32> -> vector<20x16xf32>
    %76 = arith.truncf %75 : vector<20x16xf32> to vector<20x16xbf16>
    %77 = tpu.concatenate %57, %76 in 1 : vector<20x16xbf16>, vector<20x16xbf16> -> vector<20x32xbf16>
    %c0_28 = arith.constant 0 : index
    %c0_29 = arith.constant 0 : index
    %c0_30 = arith.constant 0 : index
    %78 = vector.load %arg6[%c0_28, %c0_29, %c0_30] : memref<1x32x32xbf16, #tpu.memory_space<vmem>>, vector<1x32x32xbf16>
    %79 = vector.shape_cast %78 : vector<1x32x32xbf16> to vector<32x32xbf16>
    %cst_31 = arith.constant dense<0.000000e+00> : vector<20x32xf32>
    %80 = tpu.matmul %77, %79, %cst_31 {dimension_numbers = #tpu.dot_dimension_numbers<[1], [0], [0], [1], [0, 0, 1, 1], [], []>} : vector<20x32xbf16>, vector<32x32xbf16>, vector<20x32xf32> -> vector<20x32xf32>
    %81 = arith.addf %3, %80 : vector<20x32xf32>
    %c0_32 = arith.constant 0 : index
    %c0_33 = arith.constant 0 : index
    %c0_34 = arith.constant 0 : index
    %82 = vector.load %arg7[%c0_32, %c0_33, %c0_34] : memref<1x1x32xf32, #tpu.memory_space<vmem>>, vector<1x1x32xf32>
    %83 = vector.shape_cast %82 : vector<1x1x32xf32> to vector<1x32xf32>
    %84 = vector.broadcast %83 : vector<1x32xf32> to vector<20x32xf32>
    %85 = arith.addf %81, %84 : vector<20x32xf32>
    %c0_35 = arith.constant 0 : index
    %c2 = arith.constant 2 : index
    %c0_36 = arith.constant 0 : index
    %86 = vector.load %arg3[%c0_35, %c2, %c0_36] : memref<1x4x32xf32, #tpu.memory_space<vmem>>, vector<1x1x32xf32>
    %87 = vector.shape_cast %86 : vector<1x1x32xf32> to vector<1x32xf32>
    %c0_37 = arith.constant 0 : index
    %c3 = arith.constant 3 : index
    %c0_38 = arith.constant 0 : index
    %88 = vector.load %arg3[%c0_37, %c3, %c0_38] : memref<1x4x32xf32, #tpu.memory_space<vmem>>, vector<1x1x32xf32>
    %89 = vector.shape_cast %88 : vector<1x1x32xf32> to vector<1x32xf32>
    %cst_39 = arith.constant dense<0.000000e+00> : vector<20xf32>
    %90 = vector.multi_reduction <add>, %85, %cst_39 [1] : vector<20x32xf32> to vector<20xf32>
    %91 = vector.shape_cast %90 : vector<20xf32> to vector<20x1xf32>
    %cst_40 = arith.constant 3.200000e+01 : f32
    %92 = vector.broadcast %cst_40 : f32 to vector<20x1xf32>
    %93 = arith.divf %91, %92 : vector<20x1xf32>
    %94 = vector.broadcast %93 : vector<20x1xf32> to vector<20x32xf32>
    %95 = arith.subf %85, %94 : vector<20x32xf32>
    %96 = arith.mulf %95, %95 : vector<20x32xf32>
    %cst_41 = arith.constant dense<0.000000e+00> : vector<20xf32>
    %97 = vector.multi_reduction <add>, %96, %cst_41 [1] : vector<20x32xf32> to vector<20xf32>
    %98 = vector.shape_cast %97 : vector<20xf32> to vector<20x1xf32>
    %cst_42 = arith.constant 3.200000e+01 : f32
    %99 = vector.broadcast %cst_42 : f32 to vector<20x1xf32>
    %100 = arith.divf %98, %99 : vector<20x1xf32>
    %101 = vector.broadcast %93 : vector<20x1xf32> to vector<20x32xf32>
    %102 = arith.subf %85, %101 : vector<20x32xf32>
    %cst_43 = arith.constant 9.99999974E-6 : f32
    %103 = vector.broadcast %cst_43 : f32 to vector<20x1xf32>
    %104 = arith.addf %100, %103 : vector<20x1xf32>
    %105 = math.rsqrt %104 : vector<20x1xf32>
    %106 = vector.broadcast %105 : vector<20x1xf32> to vector<20x32xf32>
    %107 = arith.mulf %102, %106 : vector<20x32xf32>
    %108 = vector.broadcast %87 : vector<1x32xf32> to vector<20x32xf32>
    %109 = arith.mulf %107, %108 : vector<20x32xf32>
    %110 = vector.broadcast %89 : vector<1x32xf32> to vector<20x32xf32>
    %111 = arith.addf %109, %110 : vector<20x32xf32>
    %112 = arith.truncf %111 : vector<20x32xf32> to vector<20x32xbf16>
    %c0_44 = arith.constant 0 : index
    %c0_45 = arith.constant 0 : index
    %c0_46 = arith.constant 0 : index
    %113 = vector.load %arg11[%c0_44, %c0_45, %c0_46] : memref<1x1x32xf32, #tpu.memory_space<vmem>>, vector<1x1x32xf32>
    %114 = vector.shape_cast %113 : vector<1x1x32xf32> to vector<1x32xf32>
    %115 = vector.broadcast %114 : vector<1x32xf32> to vector<20x32xf32>
    %116 = arith.addf %85, %115 : vector<20x32xf32>
    %c0_47 = arith.constant 0 : index
    %c0_48 = arith.constant 0 : index
    %c0_49 = arith.constant 0 : index
    %117 = vector.load %arg8[%c0_47, %c0_48, %c0_49] : memref<1x32x64xbf16, #tpu.memory_space<vmem>>, vector<1x32x64xbf16>
    %118 = vector.shape_cast %117 : vector<1x32x64xbf16> to vector<32x64xbf16>
    %cst_50 = arith.constant dense<0.000000e+00> : vector<20x64xf32>
    %119 = tpu.matmul %112, %118, %cst_50 {dimension_numbers = #tpu.dot_dimension_numbers<[1], [0], [0], [1], [0, 0, 1, 1], [], []>} : vector<20x32xbf16>, vector<32x64xbf16>, vector<20x64xf32> -> vector<20x64xf32>
    %c0_51 = arith.constant 0 : index
    %c0_52 = arith.constant 0 : index
    %c0_53 = arith.constant 0 : index
    %120 = vector.load %arg9[%c0_51, %c0_52, %c0_53] : memref<1x1x64xf32, #tpu.memory_space<vmem>>, vector<1x1x64xf32>
    %121 = vector.shape_cast %120 : vector<1x1x64xf32> to vector<1x64xf32>
    %122 = vector.broadcast %121 : vector<1x64xf32> to vector<20x64xf32>
    %123 = arith.addf %119, %122 : vector<20x64xf32>
    %cst_54 = arith.constant 5.000000e-01 : f32
    %124 = vector.broadcast %cst_54 : f32 to vector<20x64xf32>
    %125 = arith.mulf %124, %123 : vector<20x64xf32>
    %cst_55 = arith.constant 0.707106769 : f32
    %126 = vector.broadcast %cst_55 : f32 to vector<20x64xf32>
    %127 = arith.mulf %123, %126 : vector<20x64xf32>
    %128 = math.erf %127 : vector<20x64xf32>
    %cst_56 = arith.constant 1.000000e+00 : f32
    %129 = vector.broadcast %cst_56 : f32 to vector<20x64xf32>
    %130 = arith.addf %129, %128 : vector<20x64xf32>
    %131 = arith.mulf %125, %130 : vector<20x64xf32>
    %132 = arith.truncf %131 : vector<20x64xf32> to vector<20x64xbf16>
    %c0_57 = arith.constant 0 : index
    %c0_58 = arith.constant 0 : index
    %c0_59 = arith.constant 0 : index
    %133 = vector.load %arg10[%c0_57, %c0_58, %c0_59] : memref<1x64x32xbf16, #tpu.memory_space<vmem>>, vector<1x64x32xbf16>
    %134 = vector.shape_cast %133 : vector<1x64x32xbf16> to vector<64x32xbf16>
    %cst_60 = arith.constant dense<0.000000e+00> : vector<20x32xf32>
    %135 = tpu.matmul %132, %134, %cst_60 {dimension_numbers = #tpu.dot_dimension_numbers<[1], [0], [0], [1], [0, 0, 1, 1], [], []>} : vector<20x64xbf16>, vector<64x32xbf16>, vector<20x32xf32> -> vector<20x32xf32>
    %136 = arith.addf %116, %135 : vector<20x32xf32>
    %c0_61 = arith.constant 0 : index
    %c0_62 = arith.constant 0 : index
    %137 = vector.load %arg19[%c0_61, %c0_62] : memref<20x32xf32, #tpu.memory_space<vmem>>, vector<20x32xf32>
    tpu.vector_store %arg19[%c0_61, %c0_62], %136 {strides = array<i32>} : memref<20x32xf32, #tpu.memory_space<vmem>>, vector<20x32xf32>,
    %c1_i32 = arith.constant 1 : i32
    %138 = arith.cmpi eq, %arg1, %c1_i32 : i32
    %139 = arith.extui %138 : i1 to i32
    %c0_i32_63 = arith.constant 0 : i32
    %140 = arith.cmpi ne, %139, %c0_i32_63 : i32
    scf.if %140 {
      %c0_64 = arith.constant 0 : index
      %c0_65 = arith.constant 0 : index
      %141 = vector.load %arg12[%c0_64, %c0_65] : memref<1x32xf32, #tpu.memory_space<vmem>>, vector<1x32xf32>
      %c0_66 = arith.constant 0 : index
      %c0_67 = arith.constant 0 : index
      %142 = vector.load %arg13[%c0_66, %c0_67] : memref<1x32xf32, #tpu.memory_space<vmem>>, vector<1x32xf32>
      %cst_68 = arith.constant dense<0.000000e+00> : vector<20xf32>
      %143 = vector.multi_reduction <add>, %136, %cst_68 [1] : vector<20x32xf32> to vector<20xf32>
      %144 = vector.shape_cast %143 : vector<20xf32> to vector<20x1xf32>
      %cst_69 = arith.constant 3.200000e+01 : f32
      %145 = vector.broadcast %cst_69 : f32 to vector<20x1xf32>
      %146 = arith.divf %144, %145 : vector<20x1xf32>
      %147 = vector.broadcast %146 : vector<20x1xf32> to vector<20x32xf32>
      %148 = arith.subf %136, %147 : vector<20x32xf32>
      %149 = arith.mulf %148, %148 : vector<20x32xf32>
      %cst_70 = arith.constant dense<0.000000e+00> : vector<20xf32>
      %150 = vector.multi_reduction <add>, %149, %cst_70 [1] : vector<20x32xf32> to vector<20xf32>
      %151 = vector.shape_cast %150 : vector<20xf32> to vector<20x1xf32>
      %cst_71 = arith.constant 3.200000e+01 : f32
      %152 = vector.broadcast %cst_71 : f32 to vector<20x1xf32>
      %153 = arith.divf %151, %152 : vector<20x1xf32>
      %154 = vector.broadcast %146 : vector<20x1xf32> to vector<20x32xf32>
      %155 = arith.subf %136, %154 : vector<20x32xf32>
      %cst_72 = arith.constant 9.99999974E-6 : f32
      %156 = vector.broadcast %cst_72 : f32 to vector<20x1xf32>
      %157 = arith.addf %153, %156 : vector<20x1xf32>
      %158 = math.rsqrt %157 : vector<20x1xf32>
      %159 = vector.broadcast %158 : vector<20x1xf32> to vector<20x32xf32>
      %160 = arith.mulf %155, %159 : vector<20x32xf32>
      %161 = vector.broadcast %141 : vector<1x32xf32> to vector<20x32xf32>
      %162 = arith.mulf %160, %161 : vector<20x32xf32>
      %163 = vector.broadcast %142 : vector<1x32xf32> to vector<20x32xf32>
      %164 = arith.addf %162, %163 : vector<20x32xf32>
      %165 = arith.truncf %164 : vector<20x32xf32> to vector<20x32xbf16>
      %166 = vector.extract_strided_slice %165 {offsets = [0, 0], sizes = [16, 32], strides = [1, 1]} : vector<20x32xbf16> to vector<16x32xbf16>
      %c0_73 = arith.constant 0 : index
      %c0_74 = arith.constant 0 : index
      %167 = vector.load %arg14[%c0_73, %c0_74] : memref<32x32xbf16, #tpu.memory_space<vmem>>, vector<32x32xbf16>
      %cst_75 = arith.constant dense<0.000000e+00> : vector<16x32xf32>
      %168 = tpu.matmul %166, %167, %cst_75 {dimension_numbers = #tpu.dot_dimension_numbers<[1], [0], [0], [1], [0, 0, 1, 1], [], []>} : vector<16x32xbf16>, vector<32x32xbf16>, vector<16x32xf32> -> vector<16x32xf32>
      %169 = vector.extract_strided_slice %165 {offsets = [16, 0], sizes = [4, 32], strides = [1, 1]} : vector<20x32xbf16> to vector<4x32xbf16>
      %c0_76 = arith.constant 0 : index
      %c0_77 = arith.constant 0 : index
      %170 = vector.load %arg15[%c0_76, %c0_77] : memref<32x32xbf16, #tpu.memory_space<vmem>>, vector<32x32xbf16>
      %cst_78 = arith.constant dense<0.000000e+00> : vector<4x32xf32>
      %171 = tpu.matmul %169, %170, %cst_78 {dimension_numbers = #tpu.dot_dimension_numbers<[1], [0], [0], [1], [0, 0, 1, 1], [], []>} : vector<4x32xbf16>, vector<32x32xbf16>, vector<4x32xf32> -> vector<4x32xf32>
      %172 = arith.mulf %168, %168 : vector<16x32xf32>
      %cst_79 = arith.constant dense<0.000000e+00> : vector<16xf32>
      %173 = vector.multi_reduction <add>, %172, %cst_79 [1] : vector<16x32xf32> to vector<16xf32>
      %174 = vector.shape_cast %173 : vector<16xf32> to vector<16x1xf32>
      %175 = math.rsqrt %174 : vector<16x1xf32>
      %176 = vector.broadcast %175 : vector<16x1xf32> to vector<16x32xf32>
      %177 = arith.mulf %168, %176 : vector<16x32xf32>
      %178 = arith.mulf %171, %171 : vector<4x32xf32>
      %cst_80 = arith.constant dense<0.000000e+00> : vector<4xf32>
      %179 = vector.multi_reduction <add>, %178, %cst_80 [1] : vector<4x32xf32> to vector<4xf32>
      %180 = vector.shape_cast %179 : vector<4xf32> to vector<4x1xf32>
      %181 = math.rsqrt %180 : vector<4x1xf32>
      %182 = vector.broadcast %181 : vector<4x1xf32> to vector<4x32xf32>
      %183 = arith.mulf %171, %182 : vector<4x32xf32>
      %184 = arith.truncf %183 : vector<4x32xf32> to vector<4x32xbf16>
      %185 = arith.truncf %177 : vector<16x32xf32> to vector<16x32xbf16>
      %cst_81 = arith.constant dense<0.000000e+00> : vector<4x16xf32>
      %186 = tpu.matmul %184, %185, %cst_81 {dimension_numbers = #tpu.dot_dimension_numbers<[1], [1], [0], [0], [0, 0, 1, 0], [], []>} : vector<4x32xbf16>, vector<16x32xbf16>, vector<4x16xf32> -> vector<4x16xf32>
      %cst_82 = arith.constant dense<0.000000e+00> : vector<16xf32>
      %187 = vector.multi_reduction <add>, %186, %cst_82 [0] : vector<4x16xf32> to vector<16xf32>
      %188 = vector.shape_cast %187 : vector<16xf32> to vector<1x16xf32>
      %cst_83 = arith.constant 4.000000e+00 : f32
      %189 = vector.broadcast %cst_83 : f32 to vector<1x16xf32>
      %190 = arith.divf %188, %189 : vector<1x16xf32>
      %191 = vector.broadcast %190 : vector<1x16xf32> to vector<4x16xf32>
      %192 = arith.subf %186, %191 : vector<4x16xf32>
      %193 = arith.mulf %192, %192 : vector<4x16xf32>
      %cst_84 = arith.constant dense<0.000000e+00> : vector<16xf32>
      %194 = vector.multi_reduction <add>, %193, %cst_84 [0] : vector<4x16xf32> to vector<16xf32>
      %195 = vector.shape_cast %194 : vector<16xf32> to vector<1x16xf32>
      %cst_85 = arith.constant 4.000000e+00 : f32
      %196 = vector.broadcast %cst_85 : f32 to vector<1x16xf32>
      %197 = arith.divf %195, %196 : vector<1x16xf32>
      %198 = vector.broadcast %190 : vector<1x16xf32> to vector<4x16xf32>
      %199 = arith.subf %186, %198 : vector<4x16xf32>
      %cst_86 = arith.constant 9.99999974E-6 : f32
      %200 = vector.broadcast %cst_86 : f32 to vector<1x16xf32>
      %201 = arith.addf %197, %200 : vector<1x16xf32>
      %202 = math.rsqrt %201 : vector<1x16xf32>
      %203 = vector.broadcast %202 : vector<1x16xf32> to vector<4x16xf32>
      %204 = arith.mulf %199, %203 : vector<4x16xf32>
      %c0_87 = arith.constant 0 : index
      %c0_88 = arith.constant 0 : index
      %205 = vector.load %arg16[%c0_87, %c0_88] : memref<4x1xf32, #tpu.memory_space<vmem>>, vector<4x1xf32>
      %206 = vector.broadcast %205 : vector<4x1xf32> to vector<4x16xf32>
      %207 = arith.mulf %204, %206 : vector<4x16xf32>
      %c0_89 = arith.constant 0 : index
      %c0_90 = arith.constant 0 : index
      %208 = vector.load %arg17[%c0_89, %c0_90] : memref<4x1xf32, #tpu.memory_space<vmem>>, vector<4x1xf32>
      %209 = vector.broadcast %208 : vector<4x1xf32> to vector<4x16xf32>
      %210 = arith.addf %207, %209 : vector<4x16xf32>
      %c0_91 = arith.constant 0 : index
      %c0_92 = arith.constant 0 : index
      %c0_93 = arith.constant 0 : index
      %211 = vector.load %arg18[%c0_91, %c0_92, %c0_93] : memref<1x4x16xf32, #tpu.memory_space<vmem>>, vector<1x4x16xf32>
      %212 = vector.shape_cast %211 : vector<1x4x16xf32> to vector<4x16xf32>
      %213 = vector.shape_cast %210 : vector<4x16xf32> to vector<1x4x16xf32>
      tpu.vector_store %arg18[%c0_91, %c0_92, %c0_93], %213 {strides = array<i32>} : memref<1x4x16xf32, #tpu.memory_space<vmem>>, vector<1x4x16xf32>,
    } else {
    }
    return
  }
  func.func @transform_0(%arg0: i32, %arg1: i32) -> (i32, i32, i32) {
    %c0_i32 = arith.constant 0 : i32
    %c0_i32_0 = arith.constant 0 : i32
    %c0_i32_1 = arith.constant 0 : i32
    return %arg0, %c0_i32, %c0_i32_0 : i32, i32, i32
  }
  func.func @transform_1(%arg0: i32, %arg1: i32) -> (i32, i32, i32) {
    %c0_i32 = arith.constant 0 : i32
    %c0_i32_0 = arith.constant 0 : i32
    %c0_i32_1 = arith.constant 0 : i32
    return %arg1, %c0_i32, %c0_i32_0 : i32, i32, i32
  }
  func.func @transform_2(%arg0: i32, %arg1: i32) -> (i32, i32, i32) {
    %c0_i32 = arith.constant 0 : i32
    %c0_i32_0 = arith.constant 0 : i32
    %c0_i32_1 = arith.constant 0 : i32
    return %arg1, %c0_i32, %c0_i32_0 : i32, i32, i32
  }
  func.func @transform_3(%arg0: i32, %arg1: i32) -> (i32, i32, i32) {
    %c0_i32 = arith.constant 0 : i32
    %c0_i32_0 = arith.constant 0 : i32
    %c0_i32_1 = arith.constant 0 : i32
    return %arg1, %c0_i32, %c0_i32_0 : i32, i32, i32
  }
  func.func @transform_4(%arg0: i32, %arg1: i32) -> (i32, i32, i32) {
    %c0_i32 = arith.constant 0 : i32
    %c0_i32_0 = arith.constant 0 : i32
    %c0_i32_1 = arith.constant 0 : i32
    return %arg1, %c0_i32, %c0_i32_0 : i32, i32, i32
  }
  func.func @transform_5(%arg0: i32, %arg1: i32) -> (i32, i32, i32) {
    %c0_i32 = arith.constant 0 : i32
    %c0_i32_0 = arith.constant 0 : i32
    %c0_i32_1 = arith.constant 0 : i32
    return %arg1, %c0_i32, %c0_i32_0 : i32, i32, i32
  }
  func.func @transform_6(%arg0: i32, %arg1: i32) -> (i32, i32, i32) {
    %c0_i32 = arith.constant 0 : i32
    %c0_i32_0 = arith.constant 0 : i32
    %c0_i32_1 = arith.constant 0 : i32
    return %arg1, %c0_i32, %c0_i32_0 : i32, i32, i32
  }
  func.func @transform_7(%arg0: i32, %arg1: i32) -> (i32, i32, i32) {
    %c0_i32 = arith.constant 0 : i32
    %c0_i32_0 = arith.constant 0 : i32
    %c0_i32_1 = arith.constant 0 : i32
    return %arg1, %c0_i32, %c0_i32_0 : i32, i32, i32
  }
  func.func @transform_8(%arg0: i32, %arg1: i32) -> (i32, i32, i32) {
    %c0_i32 = arith.constant 0 : i32
    %c0_i32_0 = arith.constant 0 : i32
    %c0_i32_1 = arith.constant 0 : i32
    return %arg1, %c0_i32, %c0_i32_0 : i32, i32, i32
  }
  func.func @transform_9(%arg0: i32, %arg1: i32) -> (i32, i32, i32) {
    %c0_i32 = arith.constant 0 : i32
    %c0_i32_0 = arith.constant 0 : i32
    %c0_i32_1 = arith.constant 0 : i32
    return %arg1, %c0_i32, %c0_i32_0 : i32, i32, i32
  }
  func.func @transform_10(%arg0: i32, %arg1: i32) -> (i32, i32) {
    %c0_i32 = arith.constant 0 : i32
    %c0_i32_0 = arith.constant 0 : i32
    %c0_i32_1 = arith.constant 0 : i32
    return %c0_i32, %c0_i32_0 : i32, i32
  }
  func.func @transform_11(%arg0: i32, %arg1: i32) -> (i32, i32) {
    %c0_i32 = arith.constant 0 : i32
    %c0_i32_0 = arith.constant 0 : i32
    %c0_i32_1 = arith.constant 0 : i32
    return %c0_i32, %c0_i32_0 : i32, i32
  }
  func.func @transform_12(%arg0: i32, %arg1: i32) -> (i32, i32) {
    %c0_i32 = arith.constant 0 : i32
    %c0_i32_0 = arith.constant 0 : i32
    %c0_i32_1 = arith.constant 0 : i32
    return %c0_i32, %c0_i32_0 : i32, i32
  }
  func.func @transform_13(%arg0: i32, %arg1: i32) -> (i32, i32) {
    %c0_i32 = arith.constant 0 : i32
    %c0_i32_0 = arith.constant 0 : i32
    %c0_i32_1 = arith.constant 0 : i32
    return %c0_i32, %c0_i32_0 : i32, i32
  }
  func.func @transform_14(%arg0: i32, %arg1: i32) -> (i32, i32) {
    %c0_i32 = arith.constant 0 : i32
    %c0_i32_0 = arith.constant 0 : i32
    %c0_i32_1 = arith.constant 0 : i32
    return %c0_i32, %c0_i32_0 : i32, i32
  }
  func.func @transform_15(%arg0: i32, %arg1: i32) -> (i32, i32) {
    %c0_i32 = arith.constant 0 : i32
    %c0_i32_0 = arith.constant 0 : i32
    %c0_i32_1 = arith.constant 0 : i32
    return %c0_i32, %c0_i32_0 : i32, i32
  }
  func.func @transform_16(%arg0: i32, %arg1: i32) -> (i32, i32, i32) {
    %c0_i32 = arith.constant 0 : i32
    %c0_i32_0 = arith.constant 0 : i32
    %c0_i32_1 = arith.constant 0 : i32
    return %arg0, %c0_i32, %c0_i32_0 : i32, i32, i32
  }
}

</mosaic_0001>

<llo_original>
// kernel: tpu_custom_call.1
$region0: #{tpu_custom_call.1}
  #allocation0 [shape = 'u32[]', space=smem, size = 0x4, offset = 0x4, fixed_abs, tag = 'smem constant byte address 0x4 - core index']
  #allocation1 [shape = 'u32[72,128]{1,0:T(1,128)}', space=vmem, size = 0x9000, scoped, tag = 'internal scratch']
  #allocation2 [shape = 'f32[20,32]{1,0:T(8,128)}', space=vmem, size = 0x3000, scoped, tag = 'scratch operand']
  %s0 = inlined_call_operand.vmem [shape: bf16[2,20,32], index: 0, kind: input, shape index: {}]
  %s1 = inlined_call_operand.vmem [shape: f32[2,4,32], index: 1, kind: input, shape index: {}]
  %s2 = inlined_call_operand.vmem [shape: bf16[2,32,96], index: 2, kind: input, shape index: {}]
  %s3 = inlined_call_operand.vmem [shape: f32[2,1,96], index: 3, kind: input, shape index: {}]
  %s4 = inlined_call_operand.vmem [shape: bf16[2,32,32], index: 4, kind: input, shape index: {}]
  %s5 = inlined_call_operand.vmem [shape: f32[2,1,32], index: 5, kind: input, shape index: {}]
  %s6 = inlined_call_operand.vmem [shape: bf16[2,32,64], index: 6, kind: input, shape index: {}]
  %s7 = inlined_call_operand.hbm [shape: f32[2,1,64], index: 7, kind: input, shape index: {}]
  %s8 = inlined_call_operand.vmem [shape: bf16[2,64,32], index: 8, kind: input, shape index: {}]
  %s9 = inlined_call_operand.hbm [shape: f32[2,1,32], index: 9, kind: input, shape index: {}]
  %s10 = inlined_call_operand.vmem [shape: f32[1,32], index: 10, kind: input, shape index: {}]
  %s11 = inlined_call_operand.hbm [shape: f32[1,32], index: 11, kind: input, shape index: {}]
  %s12 = inlined_call_operand.vmem [shape: bf16[32,32], index: 12, kind: input, shape index: {}]
  %s13 = inlined_call_operand.hbm [shape: bf16[32,32], index: 13, kind: input, shape index: {}]
  %s14 = inlined_call_operand.vmem [shape: f32[4,1], index: 14, kind: input, shape index: {}]
  %s15 = inlined_call_operand.vmem [shape: f32[4,1], index: 15, kind: input, shape index: {}]
  %s16 = inlined_call_operand.hbm [shape: f32[2,4,16], index: 16, kind: output, shape index: {}]
  %s17 = sld [smem:[#allocation0]]
  $region121: #{tpu_custom_call.1} parent=0
    _
  %s19 = ssub.s32 1, %s17
  %s20 = scalar_select 0, %s19, %s17
  $region1: #{tpu_custom_call.1} parent=0
    #allocation3 [shape = 'u8[1024]{0}', space=vmem, size = 0x400, scoped, tag = 'input window, operand 7']
    #allocation4 [shape = 's32[2]{0}', space=sflag, size = 0x8, scoped, tag = 'scoped memory for tpu_custom_call.1']
    #allocation5 [shape = 's32[2]{0}', space=sflag, size = 0x8, scoped, tag = 'scoped memory for tpu_custom_call.1']
    #allocation6 [shape = 'u8[1024]{0}', space=vmem, size = 0x400, scoped, tag = 'input window, operand 9']
    #allocation7 [shape = 's32[2]{0}', space=sflag, size = 0x8, scoped, tag = 'scoped memory for tpu_custom_call.1']
    #allocation8 [shape = 'u8[512]{0}', space=vmem, size = 0x400, scoped, tag = 'input window, operand 11, single buffered']
    #allocation9 [shape = 'u8[8192]{0}', space=vmem, size = 0x2000, scoped, tag = 'input window, operand 13, single buffered']
    #allocation10 [shape = 's32[1]{0}', space=sflag, size = 0x4, scoped, tag = 'scoped memory for tpu_custom_call.1']
    #allocation11 [shape = 'u8[4096]{0}', space=vmem, size = 0x1000, scoped, tag = 'output window, operand 0']
    %21 = vsyncpa [#allocation4], 0
    %s22 = scalar_lea.sflag [#allocation4], 1
    %23 = vsyncpa %s22, 0
    %24 = vsyncpa [#allocation7], 0
    %s25 = scalar_lea.sflag [#allocation7], 1
    %26 = vsyncpa %s25, 0
    %27 = vsyncpa [#allocation10], 0
    %28 = vsyncpa [#allocation5], 0
    %s29 = scalar_lea.sflag [#allocation5], 1
    %30 = vsyncpa %s29, 0
    loop: start=0, step=1, limit=6
    $region2: #{tpu_custom_call.1} parent=1 // loop_pre_header
      _
    $region3: #{tpu_custom_call.1} parent=1 // loop_header
      %s32 = sphi 0, %s36
      %p33 = scmp.ge.s32.totalorder %s32, 6
      %s39 = sphi 0, %s51
      %s40 = sphi 0, %s47
      %s41 = sphi 0, %s39
      %s42 = sphi 0, %s40
      %s43 = sphi 0, %s41
      %s44 = sphi 0, %s42
      %s54 = sphi 0, %s56
      %s57 = sphi 0, %s54
      %s58 = sphi 0, %s57
      %s74 = sphi 0, %s58
      %s80 = sphi 0, %s82
      %s83 = sphi 0, %s80
      %s84 = sphi 0, %s83
      %s100 = sphi 0, %s84
      %s106 = sphi 0, %s108
      %s109 = sphi 0, %s106
      %s110 = sphi 0, %s109
      %s126 = sphi 0, %s110
      %s132 = sphi 0, %s134
      %s135 = sphi 0, %s132
      %s136 = sphi 0, %s135
      %s152 = sphi 0, %s136
      %s158 = sphi 0, %s160
      %s161 = sphi 0, %s158
      %s162 = sphi 0, %s161
      %s178 = sphi 0, %s162
      %s184 = sphi 0, %s186
      %s187 = sphi 0, %s184
      %s188 = sphi 0, %s187
      %s204 = sphi 0, %s188
      %s210 = sphi 0, %s212
      %s213 = sphi 0, %s210
      %s214 = sphi 0, %s213
      %s230 = sphi 0, %s214
      %s236 = sphi 0, %s238
      %s239 = sphi 0, %s236
      %s240 = sphi 0, %s239
      %s256 = sphi 0, %s240
      %s262 = sphi 0, %s264
      %s265 = sphi 0, %s262
      %s266 = sphi 0, %s265
      %s282 = sphi 0, %s266
      %s288 = sphi 0, %s290
      %s291 = sphi 0, %s288
      %s292 = sphi 0, %s291
      %s308 = sphi 0, %s292
      %s312 = sphi 0, %s312
      %s314 = sphi 0, %s312
      %s315 = sphi 0, %s314
      %s329 = sphi 0, %s315
      %s333 = sphi 0, %s333
      %s335 = sphi 0, %s333
      %s336 = sphi 0, %s335
      %s350 = sphi 0, %s336
      %s354 = sphi 0, %s354
      %s356 = sphi 0, %s354
      %s357 = sphi 0, %s356
      %s371 = sphi 0, %s357
      %s375 = sphi 0, %s375
      %s377 = sphi 0, %s375
      %s378 = sphi 0, %s377
      %s392 = sphi 0, %s378
      %s396 = sphi 0, %s396
      %s398 = sphi 0, %s396
      %s399 = sphi 0, %s398
      %s413 = sphi 0, %s399
      %s417 = sphi 0, %s417
      %s419 = sphi 0, %s417
      %s420 = sphi 0, %s419
      %s434 = sphi 0, %s420
      %s440 = sphi 0, %s442
      %s443 = sphi 0, %s440
      %s444 = sphi 0, %s443
      %s460 = sphi 0, %s444
    $region4: #{tpu_custom_call.1} parent=1 // loop_header_branch
      %35 = sbr.rel (%p33) target = $region8
    $region5: #{tpu_custom_call.1} parent=1 // loop_body
      %s37 = ssub.s32 %s32, 1
      %s38 = ssub.s32 %s32, 2
      %s45 = sadd.s32 1, %s40
      %p46 = scmp.ge.s32.totalorder %s45, 2
      %s47 = scalar_select %p46, 0, %s45
      %s48 = sadd.s32 1, %s39
      %s49 = scalar_select %p46, %s48, %s39
      %p50 = scmp.ge.s32.totalorder %s49, 2
      %s51 = scalar_select %p50, 0, %s49
      %s52 = ssub.s32 %s39, %s51
      %p53 = scmp.eq.s32.totalorder %s52, 0
      %s55 = sadd.s32 %s54, 1
      %s56 = scalar_select %p53, %s54, %s55
      %p59 = pneg %p53
      %p60 = scmp.eq.s32.totalorder %s32, 3
      %p61 = por %p59, %p60
      %p62 = scmp.ne.s32.totalorder %s54, %s57
      %p63 = scmp.eq.s32.totalorder %s32, 0
      %p64 = por %p62, %p63
      %p65 = scmp.ne.s32.totalorder %s54, %s57
      %p66 = scmp.eq.s32.totalorder %s37, 3
      %p67 = por %p65, %p66
      %p68 = scmp.ne.s32.totalorder %s57, %s58
      %p69 = scmp.eq.s32.totalorder %s37, 0
      %p70 = por %p68, %p69
      %p71 = scmp.ne.s32.totalorder %s57, %s58
      %p72 = scmp.eq.s32.totalorder %s38, 3
      %p73 = por %p71, %p72
      %p75 = scmp.ne.s32.totalorder %s58, %s74
      %p76 = scmp.eq.s32.totalorder %s38, 0
      %p77 = por %p75, %p76
      %s78 = ssub.s32 %s40, %s47
      %p79 = scmp.eq.s32.totalorder %s78, 0
      %s81 = sadd.s32 %s80, 1
      %s82 = scalar_select %p79, %s80, %s81
      %p85 = pneg %p79
      %p86 = scmp.eq.s32.totalorder %s32, 3
      %p87 = por %p85, %p86
      %p88 = scmp.ne.s32.totalorder %s80, %s83
      %p89 = scmp.eq.s32.totalorder %s32, 0
      %p90 = por %p88, %p89
      %p91 = scmp.ne.s32.totalorder %s80, %s83
      %p92 = scmp.eq.s32.totalorder %s37, 3
      %p93 = por %p91, %p92
      %p94 = scmp.ne.s32.totalorder %s83, %s84
      %p95 = scmp.eq.s32.totalorder %s37, 0
      %p96 = por %p94, %p95
      %p97 = scmp.ne.s32.totalorder %s83, %s84
      %p98 = scmp.eq.s32.totalorder %s38, 3
      %p99 = por %p97, %p98
      %p101 = scmp.ne.s32.totalorder %s84, %s100
      %p102 = scmp.eq.s32.totalorder %s38, 0
      %p103 = por %p101, %p102
      %s104 = ssub.s32 %s40, %s47
      %p105 = scmp.eq.s32.totalorder %s104, 0
      %s107 = sadd.s32 %s106, 1
      %s108 = scalar_select %p105, %s106, %s107
      %p111 = pneg %p105
      %p112 = scmp.eq.s32.totalorder %s32, 3
      %p113 = por %p111, %p112
      %p114 = scmp.ne.s32.totalorder %s106, %s109
      %p115 = scmp.eq.s32.totalorder %s32, 0
      %p116 = por %p114, %p115
      %p117 = scmp.ne.s32.totalorder %s106, %s109
      %p118 = scmp.eq.s32.totalorder %s37, 3
      %p119 = por %p117, %p118
      %p120 = scmp.ne.s32.totalorder %s109, %s110
      %p121 = scmp.eq.s32.totalorder %s37, 0
      %p122 = por %p120, %p121
      %p123 = scmp.ne.s32.totalorder %s109, %s110
      %p124 = scmp.eq.s32.totalorder %s38, 3
      %p125 = por %p123, %p124
      %p127 = scmp.ne.s32.totalorder %s110, %s126
      %p128 = scmp.eq.s32.totalorder %s38, 0
      %p129 = por %p127, %p128
      %s130 = ssub.s32 %s40, %s47
      %p131 = scmp.eq.s32.totalorder %s130, 0
      %s133 = sadd.s32 %s132, 1
      %s134 = scalar_select %p131, %s132, %s133
      %p137 = pneg %p131
      %p138 = scmp.eq.s32.totalorder %s32, 3
      %p139 = por %p137, %p138
      %p140 = scmp.ne.s32.totalorder %s132, %s135
      %p141 = scmp.eq.s32.totalorder %s32, 0
      %p142 = por %p140, %p141
      %p143 = scmp.ne.s32.totalorder %s132, %s135
      %p144 = scmp.eq.s32.totalorder %s37, 3
      %p145 = por %p143, %p144
      %p146 = scmp.ne.s32.totalorder %s135, %s136
      %p147 = scmp.eq.s32.totalorder %s37, 0
      %p148 = por %p146, %p147
      %p149 = scmp.ne.s32.totalorder %s135, %s136
      %p150 = scmp.eq.s32.totalorder %s38, 3
      %p151 = por %p149, %p150
      %p153 = scmp.ne.s32.totalorder %s136, %s152
      %p154 = scmp.eq.s32.totalorder %s38, 0
      %p155 = por %p153, %p154
      %s156 = ssub.s32 %s40, %s47
      %p157 = scmp.eq.s32.totalorder %s156, 0
      %s159 = sadd.s32 %s158, 1
      %s160 = scalar_select %p157, %s158, %s159
      %p163 = pneg %p157
      %p164 = scmp.eq.s32.totalorder %s32, 3
      %p165 = por %p163, %p164
      %p166 = scmp.ne.s32.totalorder %s158, %s161
      %p167 = scmp.eq.s32.totalorder %s32, 0
      %p168 = por %p166, %p167
      %p169 = scmp.ne.s32.totalorder %s158, %s161
      %p170 = scmp.eq.s32.totalorder %s37, 3
      %p171 = por %p169, %p170
      %p172 = scmp.ne.s32.totalorder %s161, %s162
      %p173 = scmp.eq.s32.totalorder %s37, 0
      %p174 = por %p172, %p173
      %p175 = scmp.ne.s32.totalorder %s161, %s162
      %p176 = scmp.eq.s32.totalorder %s38, 3
      %p177 = por %p175, %p176
      %p179 = scmp.ne.s32.totalorder %s162, %s178
      %p180 = scmp.eq.s32.totalorder %s38, 0
      %p181 = por %p179, %p180
      %s182 = ssub.s32 %s40, %s47
      %p183 = scmp.eq.s32.totalorder %s182, 0
      %s185 = sadd.s32 %s184, 1
      %s186 = scalar_select %p183, %s184, %s185
      %p189 = pneg %p183
      %p190 = scmp.eq.s32.totalorder %s32, 3
      %p191 = por %p189, %p190
      %p192 = scmp.ne.s32.totalorder %s184, %s187
      %p193 = scmp.eq.s32.totalorder %s32, 0
      %p194 = por %p192, %p193
      %p195 = scmp.ne.s32.totalorder %s184, %s187
      %p196 = scmp.eq.s32.totalorder %s37, 3
      %p197 = por %p195, %p196
      %p198 = scmp.ne.s32.totalorder %s187, %s188
      %p199 = scmp.eq.s32.totalorder %s37, 0
      %p200 = por %p198, %p199
      %p201 = scmp.ne.s32.totalorder %s187, %s188
      %p202 = scmp.eq.s32.totalorder %s38, 3
      %p203 = por %p201, %p202
      %p205 = scmp.ne.s32.totalorder %s188, %s204
      %p206 = scmp.eq.s32.totalorder %s38, 0
      %p207 = por %p205, %p206
      %s208 = ssub.s32 %s40, %s47
      %p209 = scmp.eq.s32.totalorder %s208, 0
      %s211 = sadd.s32 %s210, 1
      %s212 = scalar_select %p209, %s210, %s211
      %p215 = pneg %p209
      %p216 = scmp.eq.s32.totalorder %s32, 3
      %p217 = por %p215, %p216
      %p218 = scmp.ne.s32.totalorder %s210, %s213
      %p219 = scmp.eq.s32.totalorder %s32, 0
      %p220 = por %p218, %p219
      %p221 = scmp.ne.s32.totalorder %s210, %s213
      %p222 = scmp.eq.s32.totalorder %s37, 3
      %p223 = por %p221, %p222
      %p224 = scmp.ne.s32.totalorder %s213, %s214
      %p225 = scmp.eq.s32.totalorder %s37, 0
      %p226 = por %p224, %p225
      %p227 = scmp.ne.s32.totalorder %s213, %s214
      %p228 = scmp.eq.s32.totalorder %s38, 3
      %p229 = por %p227, %p228
      %p231 = scmp.ne.s32.totalorder %s214, %s230
      %p232 = scmp.eq.s32.totalorder %s38, 0
      %p233 = por %p231, %p232
      %s234 = ssub.s32 %s40, %s47
      %p235 = scmp.eq.s32.totalorder %s234, 0
      %s237 = sadd.s32 %s236, 1
      %s238 = scalar_select %p235, %s236, %s237
      %p241 = pneg %p235
      %p242 = scmp.eq.s32.totalorder %s32, 3
      %p243 = por %p241, %p242
      %p244 = scmp.ne.s32.totalorder %s236, %s239
      %p245 = scmp.eq.s32.totalorder %s32, 0
      %p246 = por %p244, %p245
      %p247 = scmp.ne.s32.totalorder %s236, %s239
      %p248 = scmp.eq.s32.totalorder %s37, 3
      %p249 = por %p247, %p248
      %p250 = scmp.ne.s32.totalorder %s239, %s240
      %p251 = scmp.eq.s32.totalorder %s37, 0
      %p252 = por %p250, %p251
      %p253 = scmp.ne.s32.totalorder %s239, %s240
      %p254 = scmp.eq.s32.totalorder %s38, 3
      %p255 = por %p253, %p254
      %p257 = scmp.ne.s32.totalorder %s240, %s256
      %p258 = scmp.eq.s32.totalorder %s38, 0
      %p259 = por %p257, %p258
      %s260 = ssub.s32 %s40, %s47
      %p261 = scmp.eq.s32.totalorder %s260, 0
      %s263 = sadd.s32 %s262, 1
      %s264 = scalar_select %p261, %s262, %s263
      %p267 = pneg %p261
      %p268 = scmp.eq.s32.totalorder %s32, 3
      %p269 = por %p267, %p268
      %p270 = scmp.ne.s32.totalorder %s262, %s265
      %p271 = scmp.eq.s32.totalorder %s32, 0
      %p272 = por %p270, %p271
      %p273 = scmp.ne.s32.totalorder %s262, %s265
      %p274 = scmp.eq.s32.totalorder %s37, 3
      %p275 = por %p273, %p274
      %p276 = scmp.ne.s32.totalorder %s265, %s266
      %p277 = scmp.eq.s32.totalorder %s37, 0
      %p278 = por %p276, %p277
      %p279 = scmp.ne.s32.totalorder %s265, %s266
      %p280 = scmp.eq.s32.totalorder %s38, 3
      %p281 = por %p279, %p280
      %p283 = scmp.ne.s32.totalorder %s266, %s282
      %p284 = scmp.eq.s32.totalorder %s38, 0
      %p285 = por %p283, %p284
      %s286 = ssub.s32 %s40, %s47
      %p287 = scmp.eq.s32.totalorder %s286, 0
      %s289 = sadd.s32 %s288, 1
      %s290 = scalar_select %p287, %s288, %s289
      %p293 = pneg %p287
      %p294 = scmp.eq.s32.totalorder %s32, 3
      %p295 = por %p293, %p294
      %p296 = scmp.ne.s32.totalorder %s288, %s291
      %p297 = scmp.eq.s32.totalorder %s32, 0
      %p298 = por %p296, %p297
      %p299 = scmp.ne.s32.totalorder %s288, %s291
      %p300 = scmp.eq.s32.totalorder %s37, 3
      %p301 = por %p299, %p300
      %p302 = scmp.ne.s32.totalorder %s291, %s292
      %p303 = scmp.eq.s32.totalorder %s37, 0
      %p304 = por %p302, %p303
      %p305 = scmp.ne.s32.totalorder %s291, %s292
      %p306 = scmp.eq.s32.totalorder %s38, 3
      %p307 = por %p305, %p306
      %p309 = scmp.ne.s32.totalorder %s292, %s308
      %p310 = scmp.eq.s32.totalorder %s38, 0
      %p311 = por %p309, %p310
      %s313 = sadd.s32 %s312, 1
      %p316 = scmp.eq.s32.totalorder %s32, 3
      %p317 = scmp.ne.s32.totalorder %s312, %s314
      %p318 = scmp.eq.s32.totalorder %s32, 0
      %p319 = por %p317, %p318
      %p320 = scmp.ne.s32.totalorder %s312, %s314
      %p321 = scmp.eq.s32.totalorder %s37, 3
      %p322 = por %p320, %p321
      %p323 = scmp.ne.s32.totalorder %s314, %s315
      %p324 = scmp.eq.s32.totalorder %s37, 0
      %p325 = por %p323, %p324
      %p326 = scmp.ne.s32.totalorder %s314, %s315
      %p327 = scmp.eq.s32.totalorder %s38, 3
      %p328 = por %p326, %p327
      %p330 = scmp.ne.s32.totalorder %s315, %s329
      %p331 = scmp.eq.s32.totalorder %s38, 0
      %p332 = por %p330, %p331
      %s334 = sadd.s32 %s333, 1
      %p337 = scmp.eq.s32.totalorder %s32, 3
      %p338 = scmp.ne.s32.totalorder %s333, %s335
      %p339 = scmp.eq.s32.totalorder %s32, 0
      %p340 = por %p338, %p339
      %p341 = scmp.ne.s32.totalorder %s333, %s335
      %p342 = scmp.eq.s32.totalorder %s37, 3
      %p343 = por %p341, %p342
      %p344 = scmp.ne.s32.totalorder %s335, %s336
      %p345 = scmp.eq.s32.totalorder %s37, 0
      %p346 = por %p344, %p345
      %p347 = scmp.ne.s32.totalorder %s335, %s336
      %p348 = scmp.eq.s32.totalorder %s38, 3
      %p349 = por %p347, %p348
      %p351 = scmp.ne.s32.totalorder %s336, %s350
      %p352 = scmp.eq.s32.totalorder %s38, 0
      %p353 = por %p351, %p352
      %s355 = sadd.s32 %s354, 1
      %p358 = scmp.eq.s32.totalorder %s32, 3
      %p359 = scmp.ne.s32.totalorder %s354, %s356
      %p360 = scmp.eq.s32.totalorder %s32, 0
      %p361 = por %p359, %p360
      %p362 = scmp.ne.s32.totalorder %s354, %s356
      %p363 = scmp.eq.s32.totalorder %s37, 3
      %p364 = por %p362, %p363
      %p365 = scmp.ne.s32.totalorder %s356, %s357
      %p366 = scmp.eq.s32.totalorder %s37, 0
      %p367 = por %p365, %p366
      %p368 = scmp.ne.s32.totalorder %s356, %s357
      %p369 = scmp.eq.s32.totalorder %s38, 3
      %p370 = por %p368, %p369
      %p372 = scmp.ne.s32.totalorder %s357, %s371
      %p373 = scmp.eq.s32.totalorder %s38, 0
      %p374 = por %p372, %p373
      %s376 = sadd.s32 %s375, 1
      %p379 = scmp.eq.s32.totalorder %s32, 3
      %p380 = scmp.ne.s32.totalorder %s375, %s377
      %p381 = scmp.eq.s32.totalorder %s32, 0
      %p382 = por %p380, %p381
      %p383 = scmp.ne.s32.totalorder %s375, %s377
      %p384 = scmp.eq.s32.totalorder %s37, 3
      %p385 = por %p383, %p384
      %p386 = scmp.ne.s32.totalorder %s377, %s378
      %p387 = scmp.eq.s32.totalorder %s37, 0
      %p388 = por %p386, %p387
      %p389 = scmp.ne.s32.totalorder %s377, %s378
      %p390 = scmp.eq.s32.totalorder %s38, 3
      %p391 = por %p389, %p390
      %p393 = scmp.ne.s32.totalorder %s378, %s392
      %p394 = scmp.eq.s32.totalorder %s38, 0
      %p395 = por %p393, %p394
      %s397 = sadd.s32 %s396, 1
      %p400 = scmp.eq.s32.totalorder %s32, 3
      %p401 = scmp.ne.s32.totalorder %s396, %s398
      %p402 = scmp.eq.s32.totalorder %s32, 0
      %p403 = por %p401, %p402
      %p404 = scmp.ne.s32.totalorder %s396, %s398
      %p405 = scmp.eq.s32.totalorder %s37, 3
      %p406 = por %p404, %p405
      %p407 = scmp.ne.s32.totalorder %s398, %s399
      %p408 = scmp.eq.s32.totalorder %s37, 0
      %p409 = por %p407, %p408
      %p410 = scmp.ne.s32.totalorder %s398, %s399
      %p411 = scmp.eq.s32.totalorder %s38, 3
      %p412 = por %p410, %p411
      %p414 = scmp.ne.s32.totalorder %s399, %s413
      %p415 = scmp.eq.s32.totalorder %s38, 0
      %p416 = por %p414, %p415
      %s418 = sadd.s32 %s417, 1
      %p421 = scmp.eq.s32.totalorder %s32, 3
      %p422 = scmp.ne.s32.totalorder %s417, %s419
      %p423 = scmp.eq.s32.totalorder %s32, 0
      %p424 = por %p422, %p423
      %p425 = scmp.ne.s32.totalorder %s417, %s419
      %p426 = scmp.eq.s32.totalorder %s37, 3
      %p427 = por %p425, %p426
      %p428 = scmp.ne.s32.totalorder %s419, %s420
      %p429 = scmp.eq.s32.totalorder %s37, 0
      %p430 = por %p428, %p429
      %p431 = scmp.ne.s32.totalorder %s419, %s420
      %p432 = scmp.eq.s32.totalorder %s38, 3
      %p433 = por %p431, %p432
      %p435 = scmp.ne.s32.totalorder %s420, %s434
      %p436 = scmp.eq.s32.totalorder %s38, 0
      %p437 = por %p435, %p436
      %s438 = ssub.s32 %s39, %s51
      %p439 = scmp.eq.s32.totalorder %s438, 0
      %s441 = sadd.s32 %s440, 1
      %s442 = scalar_select %p439, %s440, %s441
      %p445 = pneg %p439
      %p446 = scmp.eq.s32.totalorder %s32, 3
      %p447 = por %p445, %p446
      %p448 = scmp.ne.s32.totalorder %s440, %s443
      %p449 = scmp.eq.s32.totalorder %s32, 0
      %p450 = por %p448, %p449
      %p451 = scmp.ne.s32.totalorder %s440, %s443
      %p452 = scmp.eq.s32.totalorder %s37, 3
      %p453 = por %p451, %p452
      %p454 = scmp.ne.s32.totalorder %s443, %s444
      %p455 = scmp.eq.s32.totalorder %s37, 0
      %p456 = por %p454, %p455
      %p457 = scmp.ne.s32.totalorder %s443, %s444
      %p458 = scmp.eq.s32.totalorder %s38, 3
      %p459 = por %p457, %p458
      %p461 = scmp.ne.s32.totalorder %s444, %s460
      %p462 = scmp.eq.s32.totalorder %s38, 0
      %p463 = por %p461, %p462
      %p464 = scmp.le.s32.totalorder 1, %s32
      %p465 = scmp.lt.s32.totalorder %s32, 5
      %p466 = pnand %p464, %p465
      %p467 = pneg %p466
      // Predicated region
      $region9: #{tpu_custom_call.1} parent=5 // pred_check
        _
      $region10: #{tpu_custom_call.1} parent=5 // pred_check_branch
        %469 = sbr.rel (%p466) target = $region12
      $region11: #{tpu_custom_call.1} parent=5 // pred_region
        %s470 = ssub.s32 %s32, 1
        // Predicated region
        $region13: #{tpu_custom_call.1} parent=11 // pred_check
          %p471 = pneg %p325
        $region14: #{tpu_custom_call.1} parent=11 // pred_check_branch
          %473 = sbr.rel (%p471) target = $region16
        $region15: #{tpu_custom_call.1} parent=11 // pred_region
          _
        $region16: #{tpu_custom_call.1} parent=11 // pred_fallthru
          _
        // Predicated region
        $region17: #{tpu_custom_call.1} parent=11 // pred_check
          %p474 = pneg %p346
        $region18: #{tpu_custom_call.1} parent=11 // pred_check_branch
          %476 = sbr.rel (%p474) target = $region20
        $region19: #{tpu_custom_call.1} parent=11 // pred_region
          %478 = vsyncadd [#allocation7], 0
          %s480 = sshll.u32 %s11, 4
          %s481 = int_to_ptr.hbm [resolvable:$true] %s480
          %s482 = sshll.u32 [#allocation8], 4
          %s483 = int_to_ptr.vmem [resolvable:$true] %s482
          %485 = dma.hbm_to_vmem [thread:$0]  %s481, 16, %s483, [#allocation7]
        $region20: #{tpu_custom_call.1} parent=11 // pred_fallthru
          _
        // Predicated region
        $region21: #{tpu_custom_call.1} parent=11 // pred_check
          %p486 = pneg %p367
        $region22: #{tpu_custom_call.1} parent=11 // pred_check_branch
          %488 = sbr.rel (%p486) target = $region24
        $region23: #{tpu_custom_call.1} parent=11 // pred_region
          _
        $region24: #{tpu_custom_call.1} parent=11 // pred_fallthru
          _
        // Predicated region
        $region25: #{tpu_custom_call.1} parent=11 // pred_check
          %p489 = pneg %p388
        $region26: #{tpu_custom_call.1} parent=11 // pred_check_branch
          %491 = sbr.rel (%p489) target = $region28
        $region27: #{tpu_custom_call.1} parent=11 // pred_region
          %493 = vsyncadd [#allocation10], 0
          %s494 = sshll.u32 %s13, 4
          %s495 = int_to_ptr.hbm [resolvable:$true] %s494
          %s496 = sshll.u32 [#allocation9], 4
          %s497 = int_to_ptr.vmem [resolvable:$true] %s496
          %502 = dma.hbm_to_vmem [thread:$0]  %s495, 256, %s497, [#allocation10], 64, 64, 4
        $region28: #{tpu_custom_call.1} parent=11 // pred_fallthru
          _
        // Predicated region
        $region29: #{tpu_custom_call.1} parent=11 // pred_check
          %p503 = pneg %p409
        $region30: #{tpu_custom_call.1} parent=11 // pred_check_branch
          %505 = sbr.rel (%p503) target = $region32
        $region31: #{tpu_custom_call.1} parent=11 // pred_region
          _
        $region32: #{tpu_custom_call.1} parent=11 // pred_fallthru
          _
        // Predicated region
        $region33: #{tpu_custom_call.1} parent=11 // pred_check
          %p506 = pneg %p430
        $region34: #{tpu_custom_call.1} parent=11 // pred_check_branch
          %508 = sbr.rel (%p506) target = $region36
        $region35: #{tpu_custom_call.1} parent=11 // pred_region
          _
        $region36: #{tpu_custom_call.1} parent=11 // pred_fallthru
          _
      $region12: #{tpu_custom_call.1} parent=5 // pred_fallthru
        _
      %p509 = scmp.lt.s32.totalorder %s32, 4
      // Predicated region
      $region37: #{tpu_custom_call.1} parent=5 // pred_check
        %p510 = pneg %p509
      $region38: #{tpu_custom_call.1} parent=5 // pred_check_branch
        %512 = sbr.rel (%p510) target = $region40
      $region39: #{tpu_custom_call.1} parent=5 // pred_region
        // Predicated region
        $region41: #{tpu_custom_call.1} parent=39 // pred_check
          %p513 = pneg %p64
        $region42: #{tpu_custom_call.1} parent=39 // pred_check_branch
          %515 = sbr.rel (%p513) target = $region44
        $region43: #{tpu_custom_call.1} parent=39 // pred_region
          %p516 = scmp.lt.s32.totalorder %s39, 1
          %s517 = scalar_select %p516, %s39, 1
          %s518 = smul.addr %s517, 3
          %s519 = smul.addr %s518, 4
          %s520 = scalar_lea.vmem %s0, %s519
        $region44: #{tpu_custom_call.1} parent=39 // pred_fallthru
          _
        // Predicated region
        $region45: #{tpu_custom_call.1} parent=39 // pred_check
          %p521 = pneg %p90
        $region46: #{tpu_custom_call.1} parent=39 // pred_check_branch
          %523 = sbr.rel (%p521) target = $region48
        $region47: #{tpu_custom_call.1} parent=39 // pred_region
          %p524 = scmp.lt.s32.totalorder %s40, 1
          %s525 = scalar_select %p524, %s40, 1
          %s526 = smul.addr %s525, 4
          %s527 = scalar_lea.vmem %s1, %s526
        $region48: #{tpu_custom_call.1} parent=39 // pred_fallthru
          _
        // Predicated region
        $region49: #{tpu_custom_call.1} parent=39 // pred_check
          %p528 = pneg %p116
        $region50: #{tpu_custom_call.1} parent=39 // pred_check_branch
          %530 = sbr.rel (%p528) target = $region52
        $region51: #{tpu_custom_call.1} parent=39 // pred_region
          %p531 = scmp.lt.s32.totalorder %s40, 1
          %s532 = scalar_select %p531, %s40, 1
          %s533 = smul.addr %s532, 4
          %s534 = smul.addr %s533, 4
          %s535 = scalar_lea.vmem %s2, %s534
        $region52: #{tpu_custom_call.1} parent=39 // pred_fallthru
          _
        // Predicated region
        $region53: #{tpu_custom_call.1} parent=39 // pred_check
          %p536 = pneg %p142
        $region54: #{tpu_custom_call.1} parent=39 // pred_check_branch
          %538 = sbr.rel (%p536) target = $region56
        $region55: #{tpu_custom_call.1} parent=39 // pred_region
          %p539 = scmp.lt.s32.totalorder %s40, 1
          %s540 = scalar_select %p539, %s40, 1
          %s541 = scalar_lea.vmem %s3, %s540
        $region56: #{tpu_custom_call.1} parent=39 // pred_fallthru
          _
        // Predicated region
        $region57: #{tpu_custom_call.1} parent=39 // pred_check
          %p542 = pneg %p168
        $region58: #{tpu_custom_call.1} parent=39 // pred_check_branch
          %544 = sbr.rel (%p542) target = $region60
        $region59: #{tpu_custom_call.1} parent=39 // pred_region
          %p545 = scmp.lt.s32.totalorder %s40, 1
          %s546 = scalar_select %p545, %s40, 1
          %s547 = smul.addr %s546, 4
          %s548 = smul.addr %s547, 4
          %s549 = scalar_lea.vmem %s4, %s548
        $region60: #{tpu_custom_call.1} parent=39 // pred_fallthru
          _
        // Predicated region
        $region61: #{tpu_custom_call.1} parent=39 // pred_check
          %p550 = pneg %p194
        $region62: #{tpu_custom_call.1} parent=39 // pred_check_branch
          %552 = sbr.rel (%p550) target = $region64
        $region63: #{tpu_custom_call.1} parent=39 // pred_region
          %p553 = scmp.lt.s32.totalorder %s40, 1
          %s554 = scalar_select %p553, %s40, 1
          %s555 = scalar_lea.vmem %s5, %s554
        $region64: #{tpu_custom_call.1} parent=39 // pred_fallthru
          _
        // Predicated region
        $region65: #{tpu_custom_call.1} parent=39 // pred_check
          %p556 = pneg %p220
        $region66: #{tpu_custom_call.1} parent=39 // pred_check_branch
          %558 = sbr.rel (%p556) target = $region68
        $region67: #{tpu_custom_call.1} parent=39 // pred_region
          %p559 = scmp.lt.s32.totalorder %s40, 1
          %s560 = scalar_select %p559, %s40, 1
          %s561 = smul.addr %s560, 4
          %s562 = smul.addr %s561, 4
          %s563 = scalar_lea.vmem %s6, %s562
        $region68: #{tpu_custom_call.1} parent=39 // pred_fallthru
          _
        // Predicated region
        $region69: #{tpu_custom_call.1} parent=39 // pred_check
          %p564 = pneg %p246
        $region70: #{tpu_custom_call.1} parent=39 // pred_check_branch
          %566 = sbr.rel (%p564) target = $region72
        $region71: #{tpu_custom_call.1} parent=39 // pred_region
          %s567 = sand.u32 %s236, 1
          %s568 = scalar_lea.sflag [#allocation4], %s567
          %s569 = sand.u32 %s236, 1
          %s570 = scalar_lea.vmem [#allocation3], %s569
          %572 = vsyncadd %s568, 0
          %s573 = scalar_lea.hbm %s7, %s40
          %s575 = sshll.u32 %s573, 4
          %s576 = int_to_ptr.hbm [resolvable:$true] %s575
          %s577 = sshll.u32 %s570, 4
          %s578 = int_to_ptr.vmem [resolvable:$true] %s577
          %580 = dma.hbm_to_vmem [thread:$0]  %s576, 16, %s578, %s568
        $region72: #{tpu_custom_call.1} parent=39 // pred_fallthru
          _
        // Predicated region
        $region73: #{tpu_custom_call.1} parent=39 // pred_check
          %p581 = pneg %p272
        $region74: #{tpu_custom_call.1} parent=39 // pred_check_branch
          %583 = sbr.rel (%p581) target = $region76
        $region75: #{tpu_custom_call.1} parent=39 // pred_region
          %p584 = scmp.lt.s32.totalorder %s40, 1
          %s585 = scalar_select %p584, %s40, 1
          %s586 = smul.addr %s585, 8
          %s587 = smul.addr %s586, 4
          %s588 = scalar_lea.vmem %s8, %s587
        $region76: #{tpu_custom_call.1} parent=39 // pred_fallthru
          _
        // Predicated region
        $region77: #{tpu_custom_call.1} parent=39 // pred_check
          %p589 = pneg %p298
        $region78: #{tpu_custom_call.1} parent=39 // pred_check_branch
          %591 = sbr.rel (%p589) target = $region80
        $region79: #{tpu_custom_call.1} parent=39 // pred_region
          %s592 = sand.u32 %s32, 1
          %s593 = scalar_lea.sflag [#allocation7], %s592
          %s594 = sand.u32 %s288, 1
          %s595 = scalar_lea.vmem [#allocation6], %s594
          %597 = vsyncadd %s593, 0
          %s598 = scalar_lea.hbm %s9, %s40
          %s600 = sshll.u32 %s598, 4
          %s601 = int_to_ptr.hbm [resolvable:$true] %s600
          %s602 = sshll.u32 %s595, 4
          %s603 = int_to_ptr.vmem [resolvable:$true] %s602
          %605 = dma.hbm_to_vmem [thread:$0]  %s601, 16, %s603, %s593
        $region80: #{tpu_custom_call.1} parent=39 // pred_fallthru
          _
      $region40: #{tpu_custom_call.1} parent=5 // pred_fallthru
        _
      %p606 = scmp.le.s32.totalorder 1, %s32
      %p607 = scmp.lt.s32.totalorder %s32, 5
      %p608 = pnand %p606, %p607
      %p609 = pneg %p608
      // Predicated region
      $region81: #{tpu_custom_call.1} parent=5 // pred_check
        _
      $region82: #{tpu_custom_call.1} parent=5 // pred_check_branch
        %611 = sbr.rel (%p608) target = $region84
      $region83: #{tpu_custom_call.1} parent=5 // pred_region
        %s612 = ssub.s32 %s32, 1
        %s613 = sand.u32 %s239, 1
        %s614 = scalar_lea.sflag [#allocation4], %s613
        %s615 = sand.u32 %s239, 1
        %s616 = scalar_lea.vmem [#allocation3], %s615
        // Predicated region
        $region85: #{tpu_custom_call.1} parent=83 // pred_check
          %p617 = pneg %p252
        $region86: #{tpu_custom_call.1} parent=83 // pred_check_branch
          %619 = sbr.rel (%p617) target = $region88
        $region87: #{tpu_custom_call.1} parent=83 // pred_region
          %621 = dma.done %s614, 16
        $region88: #{tpu_custom_call.1} parent=83 // pred_fallthru
          _
        %s622 = sand.u32 %s37, 1
        %s623 = scalar_lea.sflag [#allocation7], %s622
        %s624 = sand.u32 %s291, 1
        %s625 = scalar_lea.vmem [#allocation6], %s624
        // Predicated region
        $region89: #{tpu_custom_call.1} parent=83 // pred_check
          %p626 = pneg %p304
        $region90: #{tpu_custom_call.1} parent=83 // pred_check_branch
          %628 = sbr.rel (%p626) target = $region92
        $region91: #{tpu_custom_call.1} parent=83 // pred_region
          %630 = dma.done %s623, 16
        $region92: #{tpu_custom_call.1} parent=83 // pred_fallthru
          _
        // Predicated region
        $region93: #{tpu_custom_call.1} parent=83 // pred_check
          %p631 = pneg %p346
        $region94: #{tpu_custom_call.1} parent=83 // pred_check_branch
          %633 = sbr.rel (%p631) target = $region96
        $region95: #{tpu_custom_call.1} parent=83 // pred_region
          %635 = dma.done [#allocation7], 16
        $region96: #{tpu_custom_call.1} parent=83 // pred_fallthru
          _
        // Predicated region
        $region97: #{tpu_custom_call.1} parent=83 // pred_check
          %p636 = pneg %p388
        $region98: #{tpu_custom_call.1} parent=83 // pred_check_branch
          %638 = sbr.rel (%p636) target = $region100
        $region99: #{tpu_custom_call.1} parent=83 // pred_region
          %640 = dma.done [#allocation10], 256
        $region100: #{tpu_custom_call.1} parent=83 // pred_fallthru
          _
        %p641 = scmp.lt.s32.totalorder %s41, 1
        %s642 = scalar_select %p641, %s41, 1
        %s643 = smul.addr %s642, 3
        %s644 = smul.addr %s643, 4
        %s645 = scalar_lea.vmem %s0, %s644
        %p646 = pneg %p70
        %p647 = pneg %p67
        %p648 = scmp.lt.s32.totalorder %s42, 1
        %s649 = scalar_select %p648, %s42, 1
        %s650 = smul.addr %s649, 4
        %s651 = scalar_lea.vmem %s1, %s650
        %p652 = pneg %p96
        %p653 = pneg %p93
        %p654 = scmp.lt.s32.totalorder %s42, 1
        %s655 = scalar_select %p654, %s42, 1
        %s656 = smul.addr %s655, 4
        %s657 = smul.addr %s656, 4
        %s658 = scalar_lea.vmem %s2, %s657
        %p659 = pneg %p122
        %p660 = pneg %p119
        %p661 = scmp.lt.s32.totalorder %s42, 1
        %s662 = scalar_select %p661, %s42, 1
        %s663 = scalar_lea.vmem %s3, %s662
        %p664 = pneg %p148
        %p665 = pneg %p145
        %p666 = scmp.lt.s32.totalorder %s42, 1
        %s667 = scalar_select %p666, %s42, 1
        %s668 = smul.addr %s667, 4
        %s669 = smul.addr %s668, 4
        %s670 = scalar_lea.vmem %s4, %s669
        %p671 = pneg %p174
        %p672 = pneg %p171
        %p673 = scmp.lt.s32.totalorder %s42, 1
        %s674 = scalar_select %p673, %s42, 1
        %s675 = scalar_lea.vmem %s5, %s674
        %p676 = pneg %p200
        %p677 = pneg %p197
        %p678 = scmp.lt.s32.totalorder %s42, 1
        %s679 = scalar_select %p678, %s42, 1
        %s680 = smul.addr %s679, 4
        %s681 = smul.addr %s680, 4
        %s682 = scalar_lea.vmem %s6, %s681
        %p683 = pneg %p226
        %p684 = pneg %p223
        %s685 = sand.u32 %s239, 1
        %s686 = scalar_lea.sflag [#allocation4], %s685
        %s687 = sand.u32 %s239, 1
        %s688 = scalar_lea.vmem [#allocation3], %s687
        %p689 = pneg %p252
        %p690 = pneg %p249
        %p691 = scmp.lt.s32.totalorder %s42, 1
        %s692 = scalar_select %p691, %s42, 1
        %s693 = smul.addr %s692, 8
        %s694 = smul.addr %s693, 4
        %s695 = scalar_lea.vmem %s8, %s694
        %p696 = pneg %p278
        %p697 = pneg %p275
        %s698 = sand.u32 %s37, 1
        %s699 = scalar_lea.sflag [#allocation7], %s698
        %s700 = sand.u32 %s291, 1
        %s701 = scalar_lea.vmem [#allocation6], %s700
        %p702 = pneg %p304
        %p703 = pneg %p301
        %p704 = pneg %p325
        %p705 = pneg %p322
        %p706 = pneg %p346
        %p707 = pneg %p343
        %p708 = pneg %p367
        %p709 = pneg %p364
        %p710 = pneg %p388
        %p711 = pneg %p385
        %p712 = pneg %p409
        %p713 = pneg %p406
        %p714 = pneg %p430
        %p715 = pneg %p427
        %p716 = pneg %p456
        %p717 = pneg %p453
        %s718 = sand.u32 %s443, 1
        %s719 = scalar_lea.sflag [#allocation5], %s718
        %s720 = sand.u32 %s443, 1
        %s721 = smul.addr %s720, 4
        %s722 = scalar_lea.vmem [#allocation11], %s721
        %p723 = scmp.lt.s32.totalorder %s41, 1
        %s724 = scalar_select %p723, %s41, 1
        %s725 = smul.addr %s724, 3
        %s726 = smul.addr %s725, 4
        %s727 = scalar_lea.vmem %s0, %s726
        %p728 = scmp.lt.s32.totalorder %s42, 1
        %s729 = scalar_select %p728, %s42, 1
        %s730 = smul.addr %s729, 4
        %s731 = scalar_lea.vmem %s1, %s730
        %p732 = scmp.lt.s32.totalorder %s42, 1
        %s733 = scalar_select %p732, %s42, 1
        %s734 = smul.addr %s733, 4
        %s735 = smul.addr %s734, 4
        %s736 = scalar_lea.vmem %s2, %s735
        %p737 = scmp.lt.s32.totalorder %s42, 1
        %s738 = scalar_select %p737, %s42, 1
        %s739 = scalar_lea.vmem %s3, %s738
        %p740 = scmp.lt.s32.totalorder %s42, 1
        %s741 = scalar_select %p740, %s42, 1
        %s742 = smul.addr %s741, 4
        %s743 = smul.addr %s742, 4
        %s744 = scalar_lea.vmem %s4, %s743
        %p745 = scmp.lt.s32.totalorder %s42, 1
        %s746 = scalar_select %p745, %s42, 1
        %s747 = scalar_lea.vmem %s5, %s746
        %p748 = scmp.lt.s32.totalorder %s42, 1
        %s749 = scalar_select %p748, %s42, 1
        %s750 = smul.addr %s749, 4
        %s751 = smul.addr %s750, 4
        %s752 = scalar_lea.vmem %s6, %s751
        %p753 = scmp.lt.s32.totalorder %s42, 1
        %s754 = scalar_select %p753, %s42, 1
        %s755 = smul.addr %s754, 8
        %s756 = smul.addr %s755, 4
        %s757 = scalar_lea.vmem %s8, %s756
        %p759 = scmp.eq.s32.totalorder %s42, 0
        // Predicated region
        $region101: #{tpu_custom_call.1} parent=83 // pred_check
          %p760 = pneg %p759
        $region102: #{tpu_custom_call.1} parent=83 // pred_check_branch
          %762 = sbr.rel (%p760) target = $region104
        $region103: #{tpu_custom_call.1} parent=83 // pred_region
          %v763 = vld [vmem:[%s727] sm:$0xf]
          %v764 = vld [vmem:[%s727 + $0x4] sm:$0xf]
          %v765 = vld [vmem:[%s727 + $0x8] sm:$0x3]
          %v766 = vunpack.c.l.bf16 %v763
          %v767 = vunpack.c.l.bf16 %v764
          %v768 = vunpack.c.l.bf16 %v765
          %vm769 = vcmask 261120
          %770 = vst.msk [vmem:[#allocation2] sm:$0xff] %vm769, %v766
          %771 = vst.msk [vmem:[#allocation2 + $0x8] sm:$0xff] %vm769, %v767
          %vm772 = vcmask 257024
          %773 = vst.msk [vmem:[#allocation2 + $0x10] sm:$0xf] %vm772, %v768
        $region104: #{tpu_custom_call.1} parent=83 // pred_fallthru
          _
        %v774 = vld [vmem:[#allocation2] sm:$0xff]
        %v775 = vld [vmem:[#allocation2 + $0x8] sm:$0xff]
        %v776 = vld [vmem:[#allocation2 + $0x10] sm:$0xf]
        %v777 = vld [vmem:[%s731] sm:$0x1]
        %v778 = vld [vmem:[%s731 + $0x1] sm:$0x1]
        %vm779 = vcmask 261120
        %v780 = vsel %vm779, %v774, 0.0
        %781 = vadd.xlane.f32.xlu0 %v780
        %v782 = vpop.xlane.xlu0 %781
        %v783 = vsel %vm779, %v775, 0.0
        %784 = vadd.xlane.f32.xlu0 %v783
        %v785 = vpop.xlane.xlu0 %784
        %vm786 = vcmask 257024
        %v787 = vsel %vm786, %v776, 0.0
        %788 = vadd.xlane.f32.xlu0 %v787
        %v789 = vpop.xlane.xlu0 %788
        %v790 = vrcp.pop 32.0
        %v791 = vmul.f32 32.0, %v790
        %v792 = vsub.f32 1.0, %v791
        %v793 = vmul.f32 %v790, %v792
        %v794 = vadd.f32 %v790, %v793
        %vm795 = vweird.f32 %v790
        %v796 = vsel %vm795, %v790, %v794
        %v797 = vmul.f32 %v782, %v796
        %v798 = vmul.f32 %v785, %v796
        %v799 = vmul.f32 %v789, %v796
        %v800 = vsub.f32 %v774, %v797
        %v801 = vsub.f32 %v775, %v798
        %v802 = vsub.f32 %v776, %v799
        %v803 = vmul.f32 %v800, %v800
        %v804 = vmul.f32 %v801, %v801
        %v805 = vmul.f32 %v802, %v802
        %v806 = vsel %vm779, %v803, 0.0
        %807 = vadd.xlane.f32.xlu0 %v806
        %v808 = vpop.xlane.xlu0 %807
        %v809 = vsel %vm779, %v804, 0.0
        %810 = vadd.xlane.f32.xlu0 %v809
        %v811 = vpop.xlane.xlu0 %810
        %v812 = vsel %vm786, %v805, 0.0
        %813 = vadd.xlane.f32.xlu0 %v812
        %v814 = vpop.xlane.xlu0 %813
        %v815 = vmul.f32 %v808, %v796
        %v816 = vmul.f32 %v811, %v796
        %v817 = vmul.f32 %v814, %v796
        %v818 = vadd.f32 %v815, 1e-05
        %v819 = vadd.f32 %v816, 1e-05
        %v820 = vadd.f32 %v817, 1e-05
        %v821 = vrsqrt.pop %v818
        %v822 = vmul.f32 %v821, %v818
        %v823 = vmul.f32 %v822, %v821
        %v824 = vmul.f32 0.5, %v823
        %v825 = vsub.f32 1.5, %v824
        %v826 = vmul.f32 %v821, %v825
        %vm827 = vweird.f32 %v818
        %vm828 = vweird.f32 %v821
        %vm829 = vmor %vm827, %vm828
        %v830 = vsel %vm829, %v821, %v826
        %v831 = vrsqrt.pop %v819
        %v832 = vmul.f32 %v831, %v819
        %v833 = vmul.f32 %v832, %v831
        %v834 = vmul.f32 0.5, %v833
        %v835 = vsub.f32 1.5, %v834
        %v836 = vmul.f32 %v831, %v835
        %vm837 = vweird.f32 %v819
        %vm838 = vweird.f32 %v831
        %vm839 = vmor %vm837, %vm838
        %v840 = vsel %vm839, %v831, %v836
        %v841 = vrsqrt.pop %v820
        %v842 = vmul.f32 %v841, %v820
        %v843 = vmul.f32 %v842, %v841
        %v844 = vmul.f32 0.5, %v843
        %v845 = vsub.f32 1.5, %v844
        %v846 = vmul.f32 %v841, %v845
        %vm847 = vweird.f32 %v820
        %vm848 = vweird.f32 %v841
        %vm849 = vmor %vm847, %vm848
        %v850 = vsel %vm849, %v841, %v846
        %v851 = vmul.f32 %v800, %v830
        %v852 = vmul.f32 %v801, %v840
        %v853 = vmul.f32 %v802, %v850
        %v854 = vperm.slane %v777, 0
        %v855 = vmul.f32 %v851, %v854
        %v856 = vmul.f32 %v852, %v854
        %v857 = vmul.f32 %v853, %v854
        %v858 = vperm.slane %v778, 0
        %v859 = vadd.f32 %v855, %v858
        %v860 = vadd.f32 %v856, %v858
        %v861 = vadd.f32 %v857, %v858
        %v862 = vpack.c.bf16 %v860, %v859
        %v863 = vpack.c.bf16 %v861, %v861
        %v864 = vld [vmem:[%s736] sm:$0xf]
        %v865 = vld [vmem:[%s736 + $0x4] sm:$0xf]
        %v866 = vld [vmem:[%s736 + $0x8] sm:$0xf]
        %v867 = vld [vmem:[%s736 + $0xc] sm:$0xf]
        %v868 = vld [vmem:[%s739] sm:$0x1]
        %v870 = vperm.slane %v868, 0
        %v876 = vunpack.c.l.b16 %v864
        %v877 = vunpack.c.l.b16 %v865
        %v878 = vunpack.c.l.b16 %v866
        %v879 = vunpack.c.l.b16 %v867
        %v880 = vpack.c.b16 %v877, %v876
        %v881 = vpack.c.b16 %v879, %v878
        %v885 = vsel %vm779, %v862, 0
        %v888 = vsel %vm779, %v863, 0
        %890 = vmatpush.bf16.msra.mxu0 0
        %891 = vmatpush.bf16.msra.mxu0 0
        %892 = vmatpush.bf16.msra.mxu0 0
        %893 = vmatpush.bf16.msra.mxu0 0
        %894 = vmatpush.bf16.msra.mxu0 0
        %895 = vmatpush.bf16.msra.mxu0 0
        %896 = vmatpush.bf16.msra.mxu0 %v881
        %897 = vmatpush.bf16.msra.mxu0 %v880
        %898 = vmatmul.bf16.gmra.mxu0 %v885
        %v899 = vpop.f32.mrf.mxu0
        %v900 = vadd.f32 %v870, %v899
        %v901 = vpop.f32.mrf.mxu0
        %v902 = vadd.f32 %v870, %v901
        %903 = vmatmul.bf16.gmra.mxu0 %v888
        %v904 = vpop.f32.mrf.mxu0
        %v905 = vadd.f32 %v870, %v904
        %v906 = vpop.f32.mrf.mxu0
        %907 = vdwg.mxu0
        %v908 = vpack.c.bf16 %v900, %v900
        %v909 = vpack.c.bf16 %v902, %v902
        %v910 = vpack.c.bf16 %v905, %v905
        %v914 = vunpack.c.l.b16 %v908
        %v915 = vunpack.c.l.b16 %v909
        %v916 = vunpack.c.l.b16 %v910
        %v917 = vpack.c.b16 %v915, %v914
        %v918 = vpack.c.b16 %v916, %v916
        %919 = vrot.lane.b32.xlu0 %v917, 96
        %v920 = vpop.permute.xlu0 %919
        %921 = vrot.lane.b32.xlu0 %v918, 96
        %v922 = vpop.permute.xlu0 %921
        %vm923 = vcmask 130048
        %v925 = vsel %vm923, %v917, 0
        %v928 = vsel %vm923, %v918, 0
        %v931 = vsel %vm923, %v920, 0
        %v934 = vsel %vm923, %v922, 0
        %936 = vmatpush.bf16.xpose.msra.mxu0 0
        %937 = vmatpush.bf16.xpose.msra.mxu0 0
        %938 = vmatpush.bf16.xpose.msra.mxu0 0
        %939 = vmatpush.bf16.xpose.msra.mxu0 0
        %940 = vmatpush.bf16.xpose.msra.mxu0 0
        %941 = vmatpush.bf16.xpose.msra.mxu0 0
        %942 = vmatpush.bf16.xpose.msra.mxu0 %v934
        %943 = vmatpush.bf16.xpose.msra.mxu0 %v931
        %944 = vmatmul.bf16.gmra.mxu0 %v925
        %v945 = vpop.f32.mrf.mxu0
        %v946 = vadd.f32 0.0, %v945
        %v947 = vpop.f32.mrf.mxu0
        %v948 = vadd.f32 0.0, %v947
        %949 = vmatmul.bf16.gmra.mxu0 %v928
        %v950 = vpop.f32.mrf.mxu0
        %v951 = vadd.f32 0.0, %v950
        %v952 = vpop.f32.mrf.mxu0
        %953 = vdwg.mxu0
        %v954 = vmul.f32 %v946, 0.25
        %v955 = vmul.f32 %v948, 0.25
        %v956 = vmul.f32 %v951, 0.25
        %vm957 = vcmask 162816
        %v958 = vsel %vm957, %v954, -inf
        %959 = vmax.xlane.f32.xlu0 %v958
        %v960 = vpop.xlane.xlu0 %959
        %v961 = vsel %vm957, %v955, -inf
        %962 = vmax.xlane.f32.xlu0 %v961
        %v963 = vpop.xlane.xlu0 %962
        %vm964 = vcmask 158720
        %v965 = vsel %vm964, %v956, -inf
        %966 = vmax.xlane.f32.xlu0 %v965
        %v967 = vpop.xlane.xlu0 %966
        %v968 = vsub.f32 %v954, %v960
        %v969 = vsub.f32 %v955, %v963
        %v970 = vsub.f32 %v956, %v967
        %v971 = vmul.f32 %v968, 1.442695
        %v972 = vpow.pop %v971
        %v973 = vmul.f32 %v969, 1.442695
        %v974 = vpow.pop %v973
        %v975 = vmul.f32 %v970, 1.442695
        %v976 = vpow.pop %v975
        %v977 = vsel %vm957, %v972, 0.0
        %978 = vadd.xlane.f32.xlu0 %v977
        %v979 = vpop.xlane.xlu0 %978
        %v980 = vsel %vm957, %v974, 0.0
        %981 = vadd.xlane.f32.xlu0 %v980
        %v982 = vpop.xlane.xlu0 %981
        %v983 = vsel %vm964, %v976, 0.0
        %984 = vadd.xlane.f32.xlu0 %v983
        %v985 = vpop.xlane.xlu0 %984
        %v986 = vrcp.pop %v979
        %v987 = vrcp.pop %v982
        %v988 = vrcp.pop %v985
        %v989 = vmul.f32 %v972, %v986
        %v990 = vmul.f32 %v974, %v987
        %v991 = vmul.f32 %v976, %v988
        %v992 = vpack.c.bf16 %v990, %v989
        %v993 = vpack.c.bf16 %v991, %v991
        %994 = vrot.lane.b32.xlu0 %v917, 64
        %v995 = vpop.permute.xlu0 %994
        %996 = vrot.lane.b32.xlu0 %v918, 64
        %v997 = vpop.permute.xlu0 %996
        %v1000 = vsel %vm957, %v992, 0
        %v1003 = vsel %vm957, %v993, 0
        %vm1005 = vcmask 1041408
        %v1007 = vsel %vm1005, %v997, 0
        %1009 = vmatpush.bf16.msra.mxu0 0
        %1010 = vmatpush.bf16.msra.mxu0 0
        %1011 = vmatpush.bf16.msra.mxu0 0
        %1012 = vmatpush.bf16.msra.mxu0 0
        %1013 = vmatpush.bf16.msra.mxu0 0
        %1014 = vmatpush.bf16.msra.mxu0 0
        %1015 = vmatpush.bf16.msra.mxu0 %v1007
        %1016 = vmatpush.bf16.msra.mxu0 %v995
        %1017 = vmatmul.bf16.gmra.mxu0 %v1000
        %v1018 = vpop.f32.mrf.mxu0
        %v1019 = vadd.f32 0.0, %v1018
        %v1020 = vpop.f32.mrf.mxu0
        %v1021 = vadd.f32 0.0, %v1020
        %1022 = vmatmul.bf16.gmra.mxu0 %v1003
        %v1023 = vpop.f32.mrf.mxu0
        %v1024 = vadd.f32 0.0, %v1023
        %v1025 = vpop.f32.mrf.mxu0
        %1026 = vdwg.mxu0
        %v1027 = vpack.c.bf16 %v1019, %v1019
        %v1028 = vpack.c.bf16 %v1021, %v1021
        %v1029 = vpack.c.bf16 %v1024, %v1024
        %1030 = vrot.lane.b32.xlu0 %v917, 112
        %v1031 = vpop.permute.xlu0 %1030
        %1032 = vrot.lane.b32.xlu0 %v918, 112
        %v1033 = vpop.permute.xlu0 %1032
        %1034 = vrot.lane.b32.xlu0 %v917, 80
        %v1035 = vpop.permute.xlu0 %1034
        %1036 = vrot.lane.b32.xlu0 %v918, 80
        %v1037 = vpop.permute.xlu0 %1036
        %v1039 = vsel %vm923, %v1031, 0
        %v1042 = vsel %vm923, %v1033, 0
        %v1045 = vsel %vm923, %v1035, 0
        %v1048 = vsel %vm923, %v1037, 0
        %1050 = vmatpush.bf16.xpose.msra.mxu0 0
        %1051 = vmatpush.bf16.xpose.msra.mxu0 0
        %1052 = vmatpush.bf16.xpose.msra.mxu0 0
        %1053 = vmatpush.bf16.xpose.msra.mxu0 0
        %1054 = vmatpush.bf16.xpose.msra.mxu0 0
        %1055 = vmatpush.bf16.xpose.msra.mxu0 0
        %1056 = vmatpush.bf16.xpose.msra.mxu0 %v1048
        %1057 = vmatpush.bf16.xpose.msra.mxu0 %v1045
        %1058 = vmatmul.bf16.gmra.mxu0 %v1039
        %v1059 = vpop.f32.mrf.mxu0
        %v1060 = vadd.f32 0.0, %v1059
        %v1061 = vpop.f32.mrf.mxu0
        %v1062 = vadd.f32 0.0, %v1061
        %1063 = vmatmul.bf16.gmra.mxu0 %v1042
        %v1064 = vpop.f32.mrf.mxu0
        %v1065 = vadd.f32 0.0, %v1064
        %v1066 = vpop.f32.mrf.mxu0
        %1067 = vdwg.mxu0
        %v1068 = vmul.f32 %v1060, 0.25
        %v1069 = vmul.f32 %v1062, 0.25
        %v1070 = vmul.f32 %v1065, 0.25
        %v1071 = vsel %vm957, %v1068, -inf
        %1072 = vmax.xlane.f32.xlu0 %v1071
        %v1073 = vpop.xlane.xlu0 %1072
        %v1074 = vsel %vm957, %v1069, -inf
        %1075 = vmax.xlane.f32.xlu0 %v1074
        %v1076 = vpop.xlane.xlu0 %1075
        %v1077 = vsel %vm964, %v1070, -inf
        %1078 = vmax.xlane.f32.xlu0 %v1077
        %v1079 = vpop.xlane.xlu0 %1078
        %v1080 = vsub.f32 %v1068, %v1073
        %v1081 = vsub.f32 %v1069, %v1076
        %v1082 = vsub.f32 %v1070, %v1079
        %v1083 = vmul.f32 %v1080, 1.442695
        %v1084 = vpow.pop %v1083
        %v1085 = vmul.f32 %v1081, 1.442695
        %v1086 = vpow.pop %v1085
        %v1087 = vmul.f32 %v1082, 1.442695
        %v1088 = vpow.pop %v1087
        %v1089 = vsel %vm957, %v1084, 0.0
        %1090 = vadd.xlane.f32.xlu0 %v1089
        %v1091 = vpop.xlane.xlu0 %1090
        %v1092 = vsel %vm957, %v1086, 0.0
        %1093 = vadd.xlane.f32.xlu0 %v1092
        %v1094 = vpop.xlane.xlu0 %1093
        %v1095 = vsel %vm964, %v1088, 0.0
        %1096 = vadd.xlane.f32.xlu0 %v1095
        %v1097 = vpop.xlane.xlu0 %1096
        %v1098 = vrcp.pop %v1091
        %v1099 = vrcp.pop %v1094
        %v1100 = vrcp.pop %v1097
        %v1101 = vmul.f32 %v1084, %v1098
        %v1102 = vmul.f32 %v1086, %v1099
        %v1103 = vmul.f32 %v1088, %v1100
        %v1104 = vpack.c.bf16 %v1102, %v1101
        %v1105 = vpack.c.bf16 %v1103, %v1103
        %1106 = vrot.lane.b32.xlu0 %v917, 48
        %v1107 = vpop.permute.xlu0 %1106
        %1108 = vrot.lane.b32.xlu0 %v918, 48
        %v1109 = vpop.permute.xlu0 %1108
        %v1112 = vsel %vm957, %v1104, 0
        %v1115 = vsel %vm957, %v1105, 0
        %v1118 = vsel %vm1005, %v1109, 0
        %1120 = vmatpush.bf16.msra.mxu0 0
        %1121 = vmatpush.bf16.msra.mxu0 0
        %1122 = vmatpush.bf16.msra.mxu0 0
        %1123 = vmatpush.bf16.msra.mxu0 0
        %1124 = vmatpush.bf16.msra.mxu0 0
        %1125 = vmatpush.bf16.msra.mxu0 0
        %1126 = vmatpush.bf16.msra.mxu0 %v1118
        %1127 = vmatpush.bf16.msra.mxu0 %v1107
        %1128 = vmatmul.bf16.gmra.mxu0 %v1112
        %v1129 = vpop.f32.mrf.mxu0
        %v1130 = vadd.f32 0.0, %v1129
        %v1131 = vpop.f32.mrf.mxu0
        %v1132 = vadd.f32 0.0, %v1131
        %1133 = vmatmul.bf16.gmra.mxu0 %v1115
        %v1134 = vpop.f32.mrf.mxu0
        %v1135 = vadd.f32 0.0, %v1134
        %v1136 = vpop.f32.mrf.mxu0
        %1137 = vdwg.mxu0
        %v1138 = vpack.c.bf16 %v1130, %v1130
        %v1139 = vpack.c.bf16 %v1132, %v1132
        %v1140 = vpack.c.bf16 %v1135, %v1135
        %v1144 = vunpack.c.l.b16 %v1027
        %v1145 = vunpack.c.l.b16 %v1028
        %v1146 = vunpack.c.l.b16 %v1029
        %v1147 = vpack.c.b16 %v1145, %v1144
        %v1148 = vpack.c.b16 %v1146, %v1146
        %v1152 = vunpack.c.l.b16 %v1138
        %v1153 = vunpack.c.l.b16 %v1139
        %v1154 = vunpack.c.l.b16 %v1140
        %v1155 = vpack.c.b16 %v1153, %v1152
        %v1156 = vpack.c.b16 %v1154, %v1154
        %1157 = vrot.lane.b32.xlu0 %v1155, 16
        %v1158 = vpop.permute.xlu0 %1157
        %1159 = vrot.lane.b32.xlu0 %v1156, 16
        %v1160 = vpop.permute.xlu0 %1159
        %v1163 = vsel %vm923, %v1147, %v1158
        %v1166 = vsel %vm923, %v1148, %v1160
        %v1167 = vld [vmem:[%s744] sm:$0xf]
        %v1168 = vld [vmem:[%s744 + $0x4] sm:$0xf]
        %v1169 = vld [vmem:[%s744 + $0x8] sm:$0xf]
        %v1170 = vld [vmem:[%s744 + $0xc] sm:$0xf]
        %v1175 = vunpack.c.l.b16 %v1167
        %v1176 = vunpack.c.l.b16 %v1168
        %v1177 = vunpack.c.l.b16 %v1169
        %v1178 = vunpack.c.l.b16 %v1170
        %v1179 = vpack.c.b16 %v1176, %v1175
        %v1180 = vpack.c.b16 %v1178, %v1177
        %v1183 = vsel %vm779, %v1163, 0
        %v1185 = vsel %vm779, %v1166, 0
        %1187 = vmatpush.bf16.msra.mxu0 0
        %1188 = vmatpush.bf16.msra.mxu0 0
        %1189 = vmatpush.bf16.msra.mxu0 0
        %1190 = vmatpush.bf16.msra.mxu0 0
        %1191 = vmatpush.bf16.msra.mxu0 0
        %1192 = vmatpush.bf16.msra.mxu0 0
        %1193 = vmatpush.bf16.msra.mxu0 %v1180
        %1194 = vmatpush.bf16.msra.mxu0 %v1179
        %1195 = vmatmul.bf16.gmra.mxu0 %v1183
        %v1196 = vpop.f32.mrf.mxu0
        %v1197 = vadd.f32 0.0, %v1196
        %v1198 = vpop.f32.mrf.mxu0
        %v1199 = vadd.f32 0.0, %v1198
        %1200 = vmatmul.bf16.gmra.mxu0 %v1185
        %v1201 = vpop.f32.mrf.mxu0
        %v1202 = vadd.f32 0.0, %v1201
        %v1203 = vpop.f32.mrf.mxu0
        %1204 = vdwg.mxu0
        %v1205 = vadd.f32 %v774, %v1197
        %v1206 = vadd.f32 %v775, %v1199
        %v1207 = vadd.f32 %v776, %v1202
        %v1208 = vld [vmem:[%s747] sm:$0x1]
        %v1210 = vperm.slane %v1208, 0
        %v1212 = vadd.f32 %v1205, %v1210
        %v1213 = vadd.f32 %v1206, %v1210
        %v1214 = vadd.f32 %v1207, %v1210
        %v1215 = vld [vmem:[%s731 + $0x2] sm:$0x1]
        %v1216 = vld [vmem:[%s731 + $0x3] sm:$0x1]
        %v1217 = vsel %vm779, %v1212, 0.0
        %1218 = vadd.xlane.f32.xlu0 %v1217
        %v1219 = vpop.xlane.xlu0 %1218
        %v1220 = vsel %vm779, %v1213, 0.0
        %1221 = vadd.xlane.f32.xlu0 %v1220
        %v1222 = vpop.xlane.xlu0 %1221
        %v1223 = vsel %vm786, %v1214, 0.0
        %1224 = vadd.xlane.f32.xlu0 %v1223
        %v1225 = vpop.xlane.xlu0 %1224
        %v1226 = vmul.f32 %v1219, %v796
        %v1227 = vmul.f32 %v1222, %v796
        %v1228 = vmul.f32 %v1225, %v796
        %v1229 = vsub.f32 %v1212, %v1226
        %v1230 = vsub.f32 %v1213, %v1227
        %v1231 = vsub.f32 %v1214, %v1228
        %v1232 = vmul.f32 %v1229, %v1229
        %v1233 = vmul.f32 %v1230, %v1230
        %v1234 = vmul.f32 %v1231, %v1231
        %v1235 = vsel %vm779, %v1232, 0.0
        %1236 = vadd.xlane.f32.xlu0 %v1235
        %v1237 = vpop.xlane.xlu0 %1236
        %v1238 = vsel %vm779, %v1233, 0.0
        %1239 = vadd.xlane.f32.xlu0 %v1238
        %v1240 = vpop.xlane.xlu0 %1239
        %v1241 = vsel %vm786, %v1234, 0.0
        %1242 = vadd.xlane.f32.xlu0 %v1241
        %v1243 = vpop.xlane.xlu0 %1242
        %v1244 = vmul.f32 %v1237, %v796
        %v1245 = vmul.f32 %v1240, %v796
        %v1246 = vmul.f32 %v1243, %v796
        %v1247 = vadd.f32 %v1244, 1e-05
        %v1248 = vadd.f32 %v1245, 1e-05
        %v1249 = vadd.f32 %v1246, 1e-05
        %v1250 = vrsqrt.pop %v1247
        %v1251 = vmul.f32 %v1250, %v1247
        %v1252 = vmul.f32 %v1251, %v1250
        %v1253 = vmul.f32 0.5, %v1252
        %v1254 = vsub.f32 1.5, %v1253
        %v1255 = vmul.f32 %v1250, %v1254
        %vm1256 = vweird.f32 %v1247
        %vm1257 = vweird.f32 %v1250
        %vm1258 = vmor %vm1256, %vm1257
        %v1259 = vsel %vm1258, %v1250, %v1255
        %v1260 = vrsqrt.pop %v1248
        %v1261 = vmul.f32 %v1260, %v1248
        %v1262 = vmul.f32 %v1261, %v1260
        %v1263 = vmul.f32 0.5, %v1262
        %v1264 = vsub.f32 1.5, %v1263
        %v1265 = vmul.f32 %v1260, %v1264
        %vm1266 = vweird.f32 %v1248
        %vm1267 = vweird.f32 %v1260
        %vm1268 = vmor %vm1266, %vm1267
        %v1269 = vsel %vm1268, %v1260, %v1265
        %v1270 = vrsqrt.pop %v1249
        %v1271 = vmul.f32 %v1270, %v1249
        %v1272 = vmul.f32 %v1271, %v1270
        %v1273 = vmul.f32 0.5, %v1272
        %v1274 = vsub.f32 1.5, %v1273
        %v1275 = vmul.f32 %v1270, %v1274
        %vm1276 = vweird.f32 %v1249
        %vm1277 = vweird.f32 %v1270
        %vm1278 = vmor %vm1276, %vm1277
        %v1279 = vsel %vm1278, %v1270, %v1275
        %v1280 = vmul.f32 %v1229, %v1259
        %v1281 = vmul.f32 %v1230, %v1269
        %v1282 = vmul.f32 %v1231, %v1279
        %v1283 = vperm.slane %v1215, 0
        %v1284 = vmul.f32 %v1280, %v1283
        %v1285 = vmul.f32 %v1281, %v1283
        %v1286 = vmul.f32 %v1282, %v1283
        %v1287 = vperm.slane %v1216, 0
        %v1288 = vadd.f32 %v1284, %v1287
        %v1289 = vadd.f32 %v1285, %v1287
        %v1290 = vadd.f32 %v1286, %v1287
        %v1291 = vpack.c.bf16 %v1289, %v1288
        %v1292 = vpack.c.bf16 %v1290, %v1290
        %v1293 = vld [vmem:[%s625] sm:$0x1]
        %v1295 = vperm.slane %v1293, 0
        %v1297 = vadd.f32 %v1212, %v1295
        %v1298 = vadd.f32 %v1213, %v1295
        %v1299 = vadd.f32 %v1214, %v1295
        %v1300 = vld [vmem:[%s752] sm:$0xf]
        %v1301 = vld [vmem:[%s752 + $0x4] sm:$0xf]
        %v1302 = vld [vmem:[%s752 + $0x8] sm:$0xf]
        %v1303 = vld [vmem:[%s752 + $0xc] sm:$0xf]
        %v1304 = vld [vmem:[%s616] sm:$0x1]
        %v1306 = vperm.slane %v1304, 0
        %v1312 = vunpack.c.l.b16 %v1300
        %v1313 = vunpack.c.l.b16 %v1301
        %v1314 = vunpack.c.l.b16 %v1302
        %v1315 = vunpack.c.l.b16 %v1303
        %v1316 = vpack.c.b16 %v1313, %v1312
        %v1317 = vpack.c.b16 %v1315, %v1314
        %v1321 = vsel %vm779, %v1291, 0
        %v1324 = vsel %vm779, %v1292, 0
        %1326 = vmatpush.bf16.msra.mxu0 0
        %1327 = vmatpush.bf16.msra.mxu0 0
        %1328 = vmatpush.bf16.msra.mxu0 0
        %1329 = vmatpush.bf16.msra.mxu0 0
        %1330 = vmatpush.bf16.msra.mxu0 0
        %1331 = vmatpush.bf16.msra.mxu0 0
        %1332 = vmatpush.bf16.msra.mxu0 %v1317
        %1333 = vmatpush.bf16.msra.mxu0 %v1316
        %1334 = vmatmul.bf16.gmra.mxu0 %v1321
        %v1335 = vpop.f32.mrf.mxu0
        %v1336 = vadd.f32 %v1306, %v1335
        %v1337 = vpop.f32.mrf.mxu0
        %v1338 = vadd.f32 %v1306, %v1337
        %1339 = vmatmul.bf16.gmra.mxu0 %v1324
        %v1340 = vpop.f32.mrf.mxu0
        %v1341 = vadd.f32 %v1306, %v1340
        %v1342 = vpop.f32.mrf.mxu0
        %1343 = vdwg.mxu0
        %v1344 = vmul.f32 %v1336, 0.5
        %v1345 = vmul.f32 %v1338, 0.5
        %v1346 = vmul.f32 %v1341, 0.5
        %v1347 = vmul.f32 %v1336, 0.70710677
        %v1348 = vmul.f32 %v1338, 0.70710677
        %v1349 = vmul.f32 %v1341, 0.70710677
        %v1350 = vmul.f32 %v1347, %v1347
        %v1351 = vmin.f32 16.0, %v1350
        %v1352 = vmul.f32 %v1351, 2.1237322e-06
        %v1353 = vadd.f32 %v1352, 0.00028619796
        %v1354 = vmul.f32 %v1351, %v1353
        %v1355 = vadd.f32 %v1354, 0.0036580483
        %v1356 = vmul.f32 %v1351, %v1355
        %v1357 = vadd.f32 %v1356, 0.05243302
        %v1358 = vmul.f32 %v1351, %v1357
        %v1359 = vadd.f32 %v1358, 0.18741608
        %v1360 = vmul.f32 %v1351, %v1359
        %v1361 = vadd.f32 %v1360, 1.1283791
        %v1362 = vmul.f32 %v1347, %v1361
        %v1363 = vmul.f32 %v1351, 3.8918573e-05
        %v1364 = vadd.f32 %v1363, 0.001143296
        %v1365 = vmul.f32 %v1351, %v1364
        %v1366 = vadd.f32 %v1365, 0.014752088
        %v1367 = vmul.f32 %v1351, %v1366
        %v1368 = vadd.f32 %v1367, 0.112945676
        %v1369 = vmul.f32 %v1351, %v1368
        %v1370 = vadd.f32 %v1369, 0.4994258
        %v1371 = vmul.f32 %v1351, %v1370
        %v1372 = vadd.f32 %v1371, 1.0
        %v1373 = vrcp.pop %v1372
        %v1374 = vmul.f32 %v1372, %v1373
        %v1375 = vsub.f32 1.0, %v1374
        %v1376 = vmul.f32 %v1373, %v1375
        %v1377 = vadd.f32 %v1373, %v1376
        %vm1378 = vweird.f32 %v1372
        %vm1379 = vweird.f32 %v1373
        %vm1380 = vmor %vm1378, %vm1379
        %v1381 = vsel %vm1380, %v1373, %v1377
        %v1382 = vand.u32 2147483647, %v1372
        %vm1383 = vcmp.eq.f32.partialorder %v1382, 8.507059e+37
        %v1384 = vand.u32 %v1372, 2147483648
        %v1385 = vor.u32 1.1754944e-38, %v1384
        %v1386 = vsel %vm1383, %v1385, %v1381
        %v1387 = vmul.f32 %v1362, %v1386
        %v1388 = vmin.f32 %v1387, 1.0
        %v1389 = vmax.f32 %v1388, -1.0
        %v1390 = vmul.f32 %v1348, %v1348
        %v1391 = vmin.f32 16.0, %v1390
        %v1392 = vmul.f32 %v1391, 2.1237322e-06
        %v1393 = vadd.f32 %v1392, 0.00028619796
        %v1394 = vmul.f32 %v1391, %v1393
        %v1395 = vadd.f32 %v1394, 0.0036580483
        %v1396 = vmul.f32 %v1391, %v1395
        %v1397 = vadd.f32 %v1396, 0.05243302
        %v1398 = vmul.f32 %v1391, %v1397
        %v1399 = vadd.f32 %v1398, 0.18741608
        %v1400 = vmul.f32 %v1391, %v1399
        %v1401 = vadd.f32 %v1400, 1.1283791
        %v1402 = vmul.f32 %v1348, %v1401
        %v1403 = vmul.f32 %v1391, 3.8918573e-05
        %v1404 = vadd.f32 %v1403, 0.001143296
        %v1405 = vmul.f32 %v1391, %v1404
        %v1406 = vadd.f32 %v1405, 0.014752088
        %v1407 = vmul.f32 %v1391, %v1406
        %v1408 = vadd.f32 %v1407, 0.112945676
        %v1409 = vmul.f32 %v1391, %v1408
        %v1410 = vadd.f32 %v1409, 0.4994258
        %v1411 = vmul.f32 %v1391, %v1410
        %v1412 = vadd.f32 %v1411, 1.0
        %v1413 = vrcp.pop %v1412
        %v1414 = vmul.f32 %v1412, %v1413
        %v1415 = vsub.f32 1.0, %v1414
        %v1416 = vmul.f32 %v1413, %v1415
        %v1417 = vadd.f32 %v1413, %v1416
        %vm1418 = vweird.f32 %v1412
        %vm1419 = vweird.f32 %v1413
        %vm1420 = vmor %vm1418, %vm1419
        %v1421 = vsel %vm1420, %v1413, %v1417
        %v1422 = vand.u32 2147483647, %v1412
        %vm1423 = vcmp.eq.f32.partialorder %v1422, 8.507059e+37
        %v1424 = vand.u32 %v1412, 2147483648
        %v1425 = vor.u32 1.1754944e-38, %v1424
        %v1426 = vsel %vm1423, %v1425, %v1421
        %v1427 = vmul.f32 %v1402, %v1426
        %v1428 = vmin.f32 %v1427, 1.0
        %v1429 = vmax.f32 %v1428, -1.0
        %v1430 = vmul.f32 %v1349, %v1349
        %v1431 = vmin.f32 16.0, %v1430
        %v1432 = vmul.f32 %v1431, 2.1237322e-06
        %v1433 = vadd.f32 %v1432, 0.00028619796
        %v1434 = vmul.f32 %v1431, %v1433
        %v1435 = vadd.f32 %v1434, 0.0036580483
        %v1436 = vmul.f32 %v1431, %v1435
        %v1437 = vadd.f32 %v1436, 0.05243302
        %v1438 = vmul.f32 %v1431, %v1437
        %v1439 = vadd.f32 %v1438, 0.18741608
        %v1440 = vmul.f32 %v1431, %v1439
        %v1441 = vadd.f32 %v1440, 1.1283791
        %v1442 = vmul.f32 %v1349, %v1441
        %v1443 = vmul.f32 %v1431, 3.8918573e-05
        %v1444 = vadd.f32 %v1443, 0.001143296
        %v1445 = vmul.f32 %v1431, %v1444
        %v1446 = vadd.f32 %v1445, 0.014752088
        %v1447 = vmul.f32 %v1431, %v1446
        %v1448 = vadd.f32 %v1447, 0.112945676
        %v1449 = vmul.f32 %v1431, %v1448
        %v1450 = vadd.f32 %v1449, 0.4994258
        %v1451 = vmul.f32 %v1431, %v1450
        %v1452 = vadd.f32 %v1451, 1.0
        %v1453 = vrcp.pop %v1452
        %v1454 = vmul.f32 %v1452, %v1453
        %v1455 = vsub.f32 1.0, %v1454
        %v1456 = vmul.f32 %v1453, %v1455
        %v1457 = vadd.f32 %v1453, %v1456
        %vm1458 = vweird.f32 %v1452
        %vm1459 = vweird.f32 %v1453
        %vm1460 = vmor %vm1458, %vm1459
        %v1461 = vsel %vm1460, %v1453, %v1457
        %v1462 = vand.u32 2147483647, %v1452
        %vm1463 = vcmp.eq.f32.partialorder %v1462, 8.507059e+37
        %v1464 = vand.u32 %v1452, 2147483648
        %v1465 = vor.u32 1.1754944e-38, %v1464
        %v1466 = vsel %vm1463, %v1465, %v1461
        %v1467 = vmul.f32 %v1442, %v1466
        %v1468 = vmin.f32 %v1467, 1.0
        %v1469 = vmax.f32 %v1468, -1.0
        %v1470 = vadd.f32 %v1389, 1.0
        %v1471 = vadd.f32 %v1429, 1.0
        %v1472 = vadd.f32 %v1469, 1.0
        %v1473 = vmul.f32 %v1344, %v1470
        %v1474 = vmul.f32 %v1345, %v1471
        %v1475 = vmul.f32 %v1346, %v1472
        %v1476 = vpack.c.bf16 %v1474, %v1473
        %v1477 = vpack.c.bf16 %v1475, %v1475
        %v1478 = vld [vmem:[%s757] sm:$0xf]
        %v1479 = vld [vmem:[%s757 + $0x4] sm:$0xf]
        %v1480 = vld [vmem:[%s757 + $0x8] sm:$0xf]
        %v1481 = vld [vmem:[%s757 + $0xc] sm:$0xf]
        %v1482 = vld [vmem:[%s757 + $0x10] sm:$0xf]
        %v1483 = vld [vmem:[%s757 + $0x14] sm:$0xf]
        %v1484 = vld [vmem:[%s757 + $0x18] sm:$0xf]
        %v1485 = vld [vmem:[%s757 + $0x1c] sm:$0xf]
        %v1494 = vunpack.c.l.b16 %v1478
        %v1495 = vunpack.c.l.b16 %v1479
        %v1496 = vunpack.c.l.b16 %v1480
        %v1497 = vunpack.c.l.b16 %v1481
        %v1498 = vunpack.c.l.b16 %v1482
        %v1499 = vunpack.c.l.b16 %v1483
        %v1500 = vunpack.c.l.b16 %v1484
        %v1501 = vunpack.c.l.b16 %v1485
        %v1502 = vpack.c.b16 %v1495, %v1494
        %v1503 = vpack.c.b16 %v1497, %v1496
        %v1504 = vpack.c.b16 %v1499, %v1498
        %v1505 = vpack.c.b16 %v1501, %v1500
        %vm1510 = vcmask 523264
        %v1512 = vsel %vm1510, %v1476, 0
        %v1515 = vsel %vm1510, %v1477, 0
        %1517 = vmatpush.bf16.msra.mxu0 0
        %1518 = vmatpush.bf16.msra.mxu0 0
        %1519 = vmatpush.bf16.msra.mxu0 0
        %1520 = vmatpush.bf16.msra.mxu0 0
        %1521 = vmatpush.bf16.msra.mxu0 %v1505
        %1522 = vmatpush.bf16.msra.mxu0 %v1504
        %1523 = vmatpush.bf16.msra.mxu0 %v1503
        %1524 = vmatpush.bf16.msra.mxu0 %v1502
        %1525 = vmatmul.bf16.gmra.mxu0 %v1512
        %v1526 = vpop.f32.mrf.mxu0
        %v1527 = vadd.f32 0.0, %v1526
        %v1528 = vpop.f32.mrf.mxu0
        %v1529 = vadd.f32 0.0, %v1528
        %1530 = vmatmul.bf16.gmra.mxu0 %v1515
        %v1531 = vpop.f32.mrf.mxu0
        %v1532 = vadd.f32 0.0, %v1531
        %v1533 = vpop.f32.mrf.mxu0
        %1534 = vdwg.mxu0
        %v1535 = vadd.f32 %v1297, %v1527
        %v1536 = vadd.f32 %v1298, %v1529
        %v1537 = vadd.f32 %v1299, %v1532
        %1538 = vst.msk [vmem:[#allocation2] sm:$0xff] %vm779, %v1535
        %1539 = vst.msk [vmem:[#allocation2 + $0x8] sm:$0xff] %vm779, %v1536
        %1540 = vst.msk [vmem:[#allocation2 + $0x10] sm:$0xf] %vm786, %v1537
        %p1541 = scmp.eq.s32.totalorder %s42, 1
        // Predicated region
        $region105: #{tpu_custom_call.1} parent=83 // pred_check
          %p1542 = pneg %p1541
        $region106: #{tpu_custom_call.1} parent=83 // pred_check_branch
          %1544 = sbr.rel (%p1542) target = $region108
        $region107: #{tpu_custom_call.1} parent=83 // pred_region
          %v1545 = vld [vmem:[%s10] sm:$0x1]
          %v1546 = vld [vmem:[#allocation8] sm:$0x1]
          %v1547 = vsel %vm779, %v1535, 0.0
          %1548 = vadd.xlane.f32.xlu0 %v1547
          %v1549 = vpop.xlane.xlu0 %1548
          %v1550 = vsel %vm779, %v1536, 0.0
          %1551 = vadd.xlane.f32.xlu0 %v1550
          %v1552 = vpop.xlane.xlu0 %1551
          %v1553 = vsel %vm786, %v1537, 0.0
          %1554 = vadd.xlane.f32.xlu0 %v1553
          %v1555 = vpop.xlane.xlu0 %1554
          %v1556 = vmul.f32 %v1549, %v796
          %v1557 = vmul.f32 %v1552, %v796
          %v1558 = vmul.f32 %v1555, %v796
          %v1559 = vsub.f32 %v1535, %v1556
          %v1560 = vsub.f32 %v1536, %v1557
          %v1561 = vsub.f32 %v1537, %v1558
          %v1562 = vmul.f32 %v1559, %v1559
          %v1563 = vmul.f32 %v1560, %v1560
          %v1564 = vmul.f32 %v1561, %v1561
          %v1565 = vsel %vm779, %v1562, 0.0
          %1566 = vadd.xlane.f32.xlu0 %v1565
          %v1567 = vpop.xlane.xlu0 %1566
          %v1568 = vsel %vm779, %v1563, 0.0
          %1569 = vadd.xlane.f32.xlu0 %v1568
          %v1570 = vpop.xlane.xlu0 %1569
          %v1571 = vsel %vm786, %v1564, 0.0
          %1572 = vadd.xlane.f32.xlu0 %v1571
          %v1573 = vpop.xlane.xlu0 %1572
          %v1574 = vmul.f32 %v1567, %v796
          %v1575 = vmul.f32 %v1570, %v796
          %v1576 = vmul.f32 %v1573, %v796
          %v1577 = vadd.f32 %v1574, 1e-05
          %v1578 = vadd.f32 %v1575, 1e-05
          %v1579 = vadd.f32 %v1576, 1e-05
          %v1580 = vrsqrt.pop %v1577
          %v1581 = vmul.f32 %v1580, %v1577
          %v1582 = vmul.f32 %v1581, %v1580
          %v1583 = vmul.f32 0.5, %v1582
          %v1584 = vsub.f32 1.5, %v1583
          %v1585 = vmul.f32 %v1580, %v1584
          %vm1586 = vweird.f32 %v1577
          %vm1587 = vweird.f32 %v1580
          %vm1588 = vmor %vm1586, %vm1587
          %v1589 = vsel %vm1588, %v1580, %v1585
          %v1590 = vrsqrt.pop %v1578
          %v1591 = vmul.f32 %v1590, %v1578
          %v1592 = vmul.f32 %v1591, %v1590
          %v1593 = vmul.f32 0.5, %v1592
          %v1594 = vsub.f32 1.5, %v1593
          %v1595 = vmul.f32 %v1590, %v1594
          %vm1596 = vweird.f32 %v1578
          %vm1597 = vweird.f32 %v1590
          %vm1598 = vmor %vm1596, %vm1597
          %v1599 = vsel %vm1598, %v1590, %v1595
          %v1600 = vrsqrt.pop %v1579
          %v1601 = vmul.f32 %v1600, %v1579
          %v1602 = vmul.f32 %v1601, %v1600
          %v1603 = vmul.f32 0.5, %v1602
          %v1604 = vsub.f32 1.5, %v1603
          %v1605 = vmul.f32 %v1600, %v1604
          %vm1606 = vweird.f32 %v1579
          %vm1607 = vweird.f32 %v1600
          %vm1608 = vmor %vm1606, %vm1607
          %v1609 = vsel %vm1608, %v1600, %v1605
          %v1610 = vmul.f32 %v1559, %v1589
          %v1611 = vmul.f32 %v1560, %v1599
          %v1612 = vmul.f32 %v1561, %v1609
          %v1614 = vperm.slane %v1545, 0
          %v1616 = vmul.f32 %v1610, %v1614
          %v1617 = vmul.f32 %v1611, %v1614
          %v1618 = vmul.f32 %v1612, %v1614
          %v1620 = vperm.slane %v1546, 0
          %v1622 = vadd.f32 %v1616, %v1620
          %v1623 = vadd.f32 %v1617, %v1620
          %v1624 = vadd.f32 %v1618, %v1620
          %v1625 = vpack.c.bf16 %v1622, %v1622
          %v1626 = vpack.c.bf16 %v1623, %v1623
          %v1627 = vpack.c.bf16 %v1624, %v1624
          %v1628 = vld [vmem:[%s12] sm:$0xf]
          %v1629 = vld [vmem:[%s12 + $0x4] sm:$0xf]
          %v1630 = vld [vmem:[%s12 + $0x8] sm:$0xf]
          %v1631 = vld [vmem:[%s12 + $0xc] sm:$0xf]
          %v1634 = vunpack.c.l.b16 %v1625
          %v1635 = vunpack.c.l.b16 %v1626
          %v1636 = vpack.c.b16 %v1635, %v1634
          %v1641 = vunpack.c.l.b16 %v1628
          %v1642 = vunpack.c.l.b16 %v1629
          %v1643 = vunpack.c.l.b16 %v1630
          %v1644 = vunpack.c.l.b16 %v1631
          %v1645 = vpack.c.b16 %v1642, %v1641
          %v1646 = vpack.c.b16 %v1644, %v1643
          %v1650 = vsel %vm779, %v1636, 0
          %1652 = vmatpush.bf16.msra.mxu0 0
          %1653 = vmatpush.bf16.msra.mxu0 0
          %1654 = vmatpush.bf16.msra.mxu0 0
          %1655 = vmatpush.bf16.msra.mxu0 0
          %1656 = vmatpush.bf16.msra.mxu0 0
          %1657 = vmatpush.bf16.msra.mxu0 0
          %1658 = vmatpush.bf16.msra.mxu0 %v1646
          %1659 = vmatpush.bf16.msra.mxu0 %v1645
          %1660 = vmatmul.bf16.gmra.mxu0 %v1650
          %v1661 = vpop.f32.mrf.mxu0
          %v1662 = vadd.f32 0.0, %v1661
          %v1663 = vpop.f32.mrf.mxu0
          %v1664 = vadd.f32 0.0, %v1663
          %1665 = vdwg.mxu0
          %v1666 = vld [vmem:[#allocation9] sm:$0xf]
          %v1667 = vld [vmem:[#allocation9 + $0x4] sm:$0xf]
          %v1668 = vld [vmem:[#allocation9 + $0x8] sm:$0xf]
          %v1669 = vld [vmem:[#allocation9 + $0xc] sm:$0xf]
          %v1674 = vunpack.c.l.b16 %v1666
          %v1675 = vunpack.c.l.b16 %v1667
          %v1676 = vunpack.c.l.b16 %v1668
          %v1677 = vunpack.c.l.b16 %v1669
          %v1678 = vpack.c.b16 %v1675, %v1674
          %v1679 = vpack.c.b16 %v1677, %v1676
          %v1683 = vsel %vm779, %v1627, 0
          %1685 = vmatpush.bf16.msra.mxu0 0
          %1686 = vmatpush.bf16.msra.mxu0 0
          %1687 = vmatpush.bf16.msra.mxu0 0
          %1688 = vmatpush.bf16.msra.mxu0 0
          %1689 = vmatpush.bf16.msra.mxu0 0
          %1690 = vmatpush.bf16.msra.mxu0 0
          %1691 = vmatpush.bf16.msra.mxu0 %v1679
          %1692 = vmatpush.bf16.msra.mxu0 %v1678
          %1693 = vmatmul.bf16.gmra.mxu0 %v1683
          %v1694 = vpop.f32.mrf.mxu0
          %v1695 = vadd.f32 0.0, %v1694
          %v1696 = vpop.f32.mrf.mxu0
          %1697 = vdwg.mxu0
          %v1698 = vmul.f32 %v1662, %v1662
          %v1699 = vmul.f32 %v1664, %v1664
          %v1700 = vsel %vm779, %v1698, 0.0
          %1701 = vadd.xlane.f32.xlu0 %v1700
          %v1702 = vpop.xlane.xlu0 %1701
          %v1703 = vsel %vm779, %v1699, 0.0
          %1704 = vadd.xlane.f32.xlu0 %v1703
          %v1705 = vpop.xlane.xlu0 %1704
          %v1706 = vrsqrt.pop %v1702
          %v1707 = vmul.f32 %v1706, %v1702
          %v1708 = vmul.f32 %v1707, %v1706
          %v1709 = vmul.f32 0.5, %v1708
          %v1710 = vsub.f32 1.5, %v1709
          %v1711 = vmul.f32 %v1706, %v1710
          %vm1712 = vweird.f32 %v1702
          %vm1713 = vweird.f32 %v1706
          %vm1714 = vmor %vm1712, %vm1713
          %v1715 = vsel %vm1714, %v1706, %v1711
          %v1716 = vrsqrt.pop %v1705
          %v1717 = vmul.f32 %v1716, %v1705
          %v1718 = vmul.f32 %v1717, %v1716
          %v1719 = vmul.f32 0.5, %v1718
          %v1720 = vsub.f32 1.5, %v1719
          %v1721 = vmul.f32 %v1716, %v1720
          %vm1722 = vweird.f32 %v1705
          %vm1723 = vweird.f32 %v1716
          %vm1724 = vmor %vm1722, %vm1723
          %v1725 = vsel %vm1724, %v1716, %v1721
          %v1726 = vmul.f32 %v1662, %v1715
          %v1727 = vmul.f32 %v1664, %v1725
          %v1728 = vmul.f32 %v1695, %v1695
          %v1729 = vsel %vm786, %v1728, 0.0
          %1730 = vadd.xlane.f32.xlu0 %v1729
          %v1731 = vpop.xlane.xlu0 %1730
          %v1732 = vrsqrt.pop %v1731
          %v1733 = vmul.f32 %v1732, %v1731
          %v1734 = vmul.f32 %v1733, %v1732
          %v1735 = vmul.f32 0.5, %v1734
          %v1736 = vsub.f32 1.5, %v1735
          %v1737 = vmul.f32 %v1732, %v1736
          %vm1738 = vweird.f32 %v1731
          %vm1739 = vweird.f32 %v1732
          %vm1740 = vmor %vm1738, %vm1739
          %v1741 = vsel %vm1740, %v1732, %v1737
          %v1742 = vmul.f32 %v1695, %v1741
          %v1743 = vpack.c.bf16 %v1742, %v1742
          %v1744 = vpack.c.bf16 %v1727, %v1726
          %v1746 = vsel %vm779, %v1743, 0
          %v1749 = vsel %vm779, %v1744, 0
          %1751 = vmatpush.bf16.xpose.msra.mxu0 0
          %1752 = vmatpush.bf16.xpose.msra.mxu0 0
          %1753 = vmatpush.bf16.xpose.msra.mxu0 0
          %1754 = vmatpush.bf16.xpose.msra.mxu0 0
          %1755 = vmatpush.bf16.xpose.msra.mxu0 0
          %1756 = vmatpush.bf16.xpose.msra.mxu0 0
          %1757 = vmatpush.bf16.xpose.msra.mxu0 0
          %1758 = vmatpush.bf16.xpose.msra.mxu0 %v1749
          %1759 = vmatmul.bf16.gmra.mxu0 %v1746
          %v1760 = vpop.f32.mrf.mxu0
          %v1761 = vadd.f32 0.0, %v1760
          %v1762 = vpop.f32.mrf.mxu0
          %1763 = vdwg.mxu0
          %vm1764 = vcmask 125952
          %v1765 = vsel %vm1764, %v1761, 0.0
          %v1766 = vrot.slane %v1765, 4
          %v1767 = vadd.f32 %v1765, %v1766
          %v1768 = vrot.slane %v1767, 2
          %v1769 = vadd.f32 %v1767, %v1768
          %v1770 = vrot.slane %v1769, 1
          %v1771 = vadd.f32 %v1769, %v1770
          %v1772 = vrcp.pop 4.0
          %v1773 = vmul.f32 4.0, %v1772
          %v1774 = vsub.f32 1.0, %v1773
          %v1775 = vmul.f32 %v1772, %v1774
          %v1776 = vadd.f32 %v1772, %v1775
          %vm1777 = vweird.f32 %v1772
          %v1778 = vsel %vm1777, %v1772, %v1776
          %v1779 = vmul.f32 %v1771, %v1778
          %v1780 = vsub.f32 %v1761, %v1779
          %v1781 = vmul.f32 %v1780, %v1780
          %v1782 = vsel %vm1764, %v1781, 0.0
          %v1783 = vrot.slane %v1782, 4
          %v1784 = vadd.f32 %v1782, %v1783
          %v1785 = vrot.slane %v1784, 2
          %v1786 = vadd.f32 %v1784, %v1785
          %v1787 = vrot.slane %v1786, 1
          %v1788 = vadd.f32 %v1786, %v1787
          %v1789 = vmul.f32 %v1788, %v1778
          %v1790 = vadd.f32 %v1789, 1e-05
          %v1791 = vrsqrt.pop %v1790
          %v1792 = vmul.f32 %v1791, %v1790
          %v1793 = vmul.f32 %v1792, %v1791
          %v1794 = vmul.f32 0.5, %v1793
          %v1795 = vsub.f32 1.5, %v1794
          %v1796 = vmul.f32 %v1791, %v1795
          %vm1797 = vweird.f32 %v1790
          %vm1798 = vweird.f32 %v1791
          %vm1799 = vmor %vm1797, %vm1798
          %v1800 = vsel %vm1799, %v1791, %v1796
          %v1801 = vmul.f32 %v1780, %v1800
          %v1802 = vld [vmem:[%s14] sm:$0xf]
          %1804 = vset.pattern.permute.xlu0 0
          %1805 = vperm.xlu0 %1804, %v1802
          %v1806 = vpop.permute.xlu0 %1805
          %v1808 = vmul.f32 %v1801, %v1806
          %v1809 = vld [vmem:[%s15] sm:$0xf]
          %1811 = vset.pattern.permute.xlu0 0
          %1812 = vperm.xlu0 %1811, %v1809
          %v1813 = vpop.permute.xlu0 %1812
          %v1815 = vadd.f32 %v1808, %v1813
          %1816 = vst.msk [vmem:[%s722] sm:$0xf] %vm1764, %v1815
        $region108: #{tpu_custom_call.1} parent=83 // pred_fallthru
          _
        %s1817 = sand.u32 %s443, 1
        %s1818 = scalar_lea.sflag [#allocation5], %s1817
        %s1819 = sand.u32 %s443, 1
        %s1820 = smul.addr %s1819, 4
        %s1821 = scalar_lea.vmem [#allocation11], %s1820
        // Predicated region
        $region109: #{tpu_custom_call.1} parent=83 // pred_check
          %p1822 = pneg %p453
        $region110: #{tpu_custom_call.1} parent=83 // pred_check_branch
          %1824 = sbr.rel (%p1822) target = $region112
        $region111: #{tpu_custom_call.1} parent=83 // pred_region
          %1826 = vsyncadd %s1818, 0
          %s1827 = smul.addr %s41, 4
          %s1828 = scalar_lea.hbm %s16, %s1827
          %s1830 = sshll.u32 %s1821, 4
          %s1831 = int_to_ptr.vmem [resolvable:$true] %s1830
          %s1832 = sshll.u32 %s1828, 4
          %s1833 = int_to_ptr.hbm [resolvable:$true] %s1832
          %1835 = dma.vmem_to_hbm [thread:$0]  %s1831, 64, %s1833, %s1818
        $region112: #{tpu_custom_call.1} parent=83 // pred_fallthru
          _
      $region84: #{tpu_custom_call.1} parent=5 // pred_fallthru
        _
      %p1836 = scmp.le.s32.totalorder 2, %s32
      // Predicated region
      $region113: #{tpu_custom_call.1} parent=5 // pred_check
        %p1837 = pneg %p1836
      $region114: #{tpu_custom_call.1} parent=5 // pred_check_branch
        %1839 = sbr.rel (%p1837) target = $region116
      $region115: #{tpu_custom_call.1} parent=5 // pred_region
        %s1840 = ssub.s32 %s32, 2
        // Predicated region
        $region117: #{tpu_custom_call.1} parent=115 // pred_check
          %p1841 = pneg %p459
        $region118: #{tpu_custom_call.1} parent=115 // pred_check_branch
          %1843 = sbr.rel (%p1841) target = $region120
        $region119: #{tpu_custom_call.1} parent=115 // pred_region
          %s1844 = sand.u32 %s444, 1
          %s1845 = scalar_lea.sflag [#allocation5], %s1844
          %s1846 = sand.u32 %s444, 1
          %s1847 = smul.addr %s1846, 4
          %s1848 = scalar_lea.vmem [#allocation11], %s1847
          %1850 = dma.done %s1845, 64
        $region120: #{tpu_custom_call.1} parent=115 // pred_fallthru
          _
      $region116: #{tpu_custom_call.1} parent=5 // pred_fallthru
        _
    $region6: #{tpu_custom_call.1} parent=1 // loop_footer
      %s36 = sadd.s32 1, %s32
    $region7: #{tpu_custom_call.1} parent=1 // loop_footer_branch
      %31 = sbr.rel target = $region3
    $region8: #{tpu_custom_call.1} parent=1 // loop_exit
      _
    %1851 = vsyncpa [#allocation4], 1
    %s1852 = scalar_lea.sflag [#allocation4], 1
    %1853 = vsyncpa %s1852, 1
    %1854 = vsyncpa [#allocation7], 1
    %s1855 = scalar_lea.sflag [#allocation7], 1
    %1856 = vsyncpa %s1855, 1
    %1857 = vsyncpa [#allocation10], 1
    %1858 = vsyncpa [#allocation5], 1
    %s1859 = scalar_lea.sflag [#allocation5], 1
    %1860 = vsyncpa %s1859, 1

</llo_original>
